<compile_context>
chip_gen: v7x
topology: tpu7x:2x2x1
jax: 0.10.0
libtpu: 0.0.40
codegen_flags: <defaults>
</compile_context>

<pallas_src>
import jax
import jax.numpy as jnp
from jax.experimental import pallas as pl
from jax.experimental.pallas import tpu as pltpu

N = 8                               # example batch (BN couples the whole batch)
C = 3                               # channels (fixed by the module)
H = W = 5                           # input spatial size (matches the spec)
K = 2                               # conv kernel size
KE = 2 * K - 1                      # 3: effective kernel of conv1(conv1(.))
H2, W2 = H - KE + 1, W - KE + 1     # 3, 3
EPS = 1e-5

# Flat parameter layout inside the single SMEM operand.
NW = C * C * KE * KE                # 81 effective conv weights [co, ci, p, q]
OFF_B = NW                          # composed conv bias   (C,)
OFF_G = NW + C                      # BN gamma             (C,)
OFF_BE = NW + 2 * C                 # BN beta              (C,)
NPARAMS = NW + 3 * C


def fused_kernel(x_ref, p_ref, out_ref):
    # x_ref  : VMEM (C, H, W, N)   -- batch in lanes; shifts on leading/sublane dims
    # p_ref  : SMEM (NPARAMS,)     -- [w_eff | b_eff | gamma | beta]
    # out_ref: VMEM (C, H2, W2, N)
    xv = x_ref[...]                                        # load the input once

    # Single composed 3x3 conv.  Window slices are hoisted out of the co loop:
    # 27 distinct windows, each reused for all C output channels; weights are
    # SMEM scalars splatted on the fly (no pre-materialized splat table).
    accs = [None] * C
    for ci in range(C):
        for p in range(KE):
            for q in range(KE):
                win = xv[ci, p:p + H2, q:q + W2, :]        # (H2, W2, N)
                for co in range(C):
                    idx = ((co * C + ci) * KE + p) * KE + q
                    term = win * p_ref[idx]
                    accs[co] = term if accs[co] is None else accs[co] + term

    # Fused BatchNorm (training-mode statistics, biased variance) per channel.
    inv_cnt = 1.0 / float(N * H2 * W2)
    outs = []
    for co in range(C):
        s = accs[co] + p_ref[OFF_B + co]                   # composed conv bias
        mean = jnp.sum(s) * inv_cnt
        d = s - mean
        var = jnp.sum(d * d) * inv_cnt
        inv = jax.lax.rsqrt(var + EPS)
        outs.append(p_ref[OFF_G + co] * (d * inv) + p_ref[OFF_BE + co])

    out_ref[...] = jnp.stack(outs, axis=0)                 # one full store


def _compose_params(w, b, gamma, beta):
    """Compose conv1(conv1(.)) into one effective KExKE conv (pure jnp, in XLA)."""
    w_eff = jnp.zeros((C, C, KE, KE), jnp.float32)
    for k1i in range(K):
        for k1j in range(K):
            for k2i in range(K):
                for k2j in range(K):
                    w_eff = w_eff.at[:, :, k1i + k2i, k1j + k2j].add(
                        jnp.einsum('om,mi->oi',
                                   w[:, :, k1i, k1j], w[:, :, k2i, k2j]))
    b_eff = b + jnp.einsum('omij,m->o', w, b)
    return jnp.concatenate(
        [w_eff.reshape(-1), b_eff, gamma, beta]).astype(jnp.float32)


@jax.jit
def model_forward(x, w, b, gamma, beta):
    params = _compose_params(w, b, gamma, beta)            # (NPARAMS,)
    x_t = jnp.transpose(x, (1, 2, 3, 0))                   # (C, H, W, N)
    out_t = pl.pallas_call(
        fused_kernel,
        out_shape=jax.ShapeDtypeStruct((C, H2, W2, N), jnp.float32),
        in_specs=[
            pl.BlockSpec(memory_space=pltpu.MemorySpace.VMEM),   # x (transposed)
            pl.BlockSpec(memory_space=pltpu.MemorySpace.SMEM),   # packed params
        ],
        out_specs=pl.BlockSpec(memory_space=pltpu.MemorySpace.VMEM),
        cost_estimate=pl.CostEstimate(
            flops=2 * N * C * C * KE * KE * H2 * W2 + 8 * N * C * H2 * W2,
            transcendentals=C,
            bytes_accessed=4 * (N * C * H * W + NPARAMS + N * C * H2 * W2)),
    )(x_t, params)
    return jnp.transpose(out_t, (3, 0, 1, 2))              # back to (N, C, H2, W2)


def reference(x, w, b, gamma, beta):
    """Pure-JAX reference of the same forward pass (conv applied twice + BN)."""
    def conv(z):
        y = jax.lax.conv_general_dilated(
            z, w, window_strides=(1, 1), padding="VALID",
            dimension_numbers=("NCHW", "OIHW", "NCHW"),
            precision=jax.lax.Precision.HIGHEST)
        return y + b.reshape(1, C, 1, 1)

    s = conv(conv(x))
    mean = jnp.mean(s, axis=(0, 2, 3), keepdims=True)
    var = jnp.mean((s - mean) ** 2, axis=(0, 2, 3), keepdims=True)
    return (gamma.reshape(1, C, 1, 1) * (s - mean) * jax.lax.rsqrt(var + EPS)
            + beta.reshape(1, C, 1, 1))


if __name__ == "__main__":
    key = jax.random.PRNGKey(0)
    kx, kw, kb, kg, kbe = jax.random.split(key, 5)

    # Deterministic parameter init (PyTorch-style uniform bounds for Conv2d).
    fan_in = C * K * K
    bound = 1.0 / (fan_in ** 0.5)
    w = jax.random.uniform(kw, (C, C, K, K), jnp.float32, -bound, bound)
    b = jax.random.uniform(kb, (C,), jnp.float32, -bound, bound)
    gamma = jax.random.uniform(kg, (C,), jnp.float32, 0.5, 1.5)
    beta = 0.1 * jax.random.normal(kbe, (C,), jnp.float32)

    x = jax.random.normal(kx, (N, C, H, W), jnp.float32)

    out = model_forward(x, w, b, gamma, beta)
    jax.block_until_ready(out)
    assert out.shape == (N, C, H2, W2)

    ref = reference(x, w, b, gamma, beta)
    err = float(jnp.max(jnp.abs(out - ref)))
    assert jnp.allclose(out, ref, rtol=1e-4, atol=1e-4), f"max abs err {err}"

    print("KERNEL_OK")
</pallas_src>

<mosaic_0001>
module attributes {stable_mosaic.version = 11 : i64} {
  func.func @fused_kernel(%arg0: memref<3x5x5x8xf32, #tpu.memory_space<vmem>>, %arg1: memref<90xf32, #tpu.memory_space<smem>>, %arg2: memref<3x3x3x8xf32, #tpu.memory_space<vmem>>) attributes {dimension_semantics = [], scalar_prefetch = 0 : i64, scratch_operands = 0 : i64, tpu.core_type = #tpu.core_type<tc>} {
    %c0 = arith.constant 0 : index
    %c0_0 = arith.constant 0 : index
    %c0_1 = arith.constant 0 : index
    %c0_2 = arith.constant 0 : index
    %0 = vector.load %arg0[%c0, %c0_0, %c0_1, %c0_2] : memref<3x5x5x8xf32, #tpu.memory_space<vmem>>, vector<3x5x5x8xf32>
    %1 = vector.extract_strided_slice %0 {offsets = [0, 0, 0, 0], sizes = [1, 3, 3, 8], strides = [1, 1, 1, 1]} : vector<3x5x5x8xf32> to vector<1x3x3x8xf32>
    %2 = vector.shape_cast %1 : vector<1x3x3x8xf32> to vector<3x3x8xf32>
    %c0_3 = arith.constant 0 : index
    %3 = memref.load %arg1[%c0_3] : memref<90xf32, #tpu.memory_space<smem>>
    %4 = vector.broadcast %3 : f32 to vector<3x3x8xf32>
    %5 = arith.mulf %2, %4 : vector<3x3x8xf32>
    %c27 = arith.constant 27 : index
    %6 = memref.load %arg1[%c27] : memref<90xf32, #tpu.memory_space<smem>>
    %7 = vector.broadcast %6 : f32 to vector<3x3x8xf32>
    %8 = arith.mulf %2, %7 : vector<3x3x8xf32>
    %c54 = arith.constant 54 : index
    %9 = memref.load %arg1[%c54] : memref<90xf32, #tpu.memory_space<smem>>
    %10 = vector.broadcast %9 : f32 to vector<3x3x8xf32>
    %11 = arith.mulf %2, %10 : vector<3x3x8xf32>
    %12 = vector.extract_strided_slice %0 {offsets = [0, 0, 1, 0], sizes = [1, 3, 3, 8], strides = [1, 1, 1, 1]} : vector<3x5x5x8xf32> to vector<1x3x3x8xf32>
    %13 = vector.shape_cast %12 : vector<1x3x3x8xf32> to vector<3x3x8xf32>
    %c1 = arith.constant 1 : index
    %14 = memref.load %arg1[%c1] : memref<90xf32, #tpu.memory_space<smem>>
    %15 = vector.broadcast %14 : f32 to vector<3x3x8xf32>
    %16 = arith.mulf %13, %15 : vector<3x3x8xf32>
    %17 = arith.addf %5, %16 : vector<3x3x8xf32>
    %c28 = arith.constant 28 : index
    %18 = memref.load %arg1[%c28] : memref<90xf32, #tpu.memory_space<smem>>
    %19 = vector.broadcast %18 : f32 to vector<3x3x8xf32>
    %20 = arith.mulf %13, %19 : vector<3x3x8xf32>
    %21 = arith.addf %8, %20 : vector<3x3x8xf32>
    %c55 = arith.constant 55 : index
    %22 = memref.load %arg1[%c55] : memref<90xf32, #tpu.memory_space<smem>>
    %23 = vector.broadcast %22 : f32 to vector<3x3x8xf32>
    %24 = arith.mulf %13, %23 : vector<3x3x8xf32>
    %25 = arith.addf %11, %24 : vector<3x3x8xf32>
    %26 = vector.extract_strided_slice %0 {offsets = [0, 0, 2, 0], sizes = [1, 3, 3, 8], strides = [1, 1, 1, 1]} : vector<3x5x5x8xf32> to vector<1x3x3x8xf32>
    %27 = vector.shape_cast %26 : vector<1x3x3x8xf32> to vector<3x3x8xf32>
    %c2 = arith.constant 2 : index
    %28 = memref.load %arg1[%c2] : memref<90xf32, #tpu.memory_space<smem>>
    %29 = vector.broadcast %28 : f32 to vector<3x3x8xf32>
    %30 = arith.mulf %27, %29 : vector<3x3x8xf32>
    %31 = arith.addf %17, %30 : vector<3x3x8xf32>
    %c29 = arith.constant 29 : index
    %32 = memref.load %arg1[%c29] : memref<90xf32, #tpu.memory_space<smem>>
    %33 = vector.broadcast %32 : f32 to vector<3x3x8xf32>
    %34 = arith.mulf %27, %33 : vector<3x3x8xf32>
    %35 = arith.addf %21, %34 : vector<3x3x8xf32>
    %c56 = arith.constant 56 : index
    %36 = memref.load %arg1[%c56] : memref<90xf32, #tpu.memory_space<smem>>
    %37 = vector.broadcast %36 : f32 to vector<3x3x8xf32>
    %38 = arith.mulf %27, %37 : vector<3x3x8xf32>
    %39 = arith.addf %25, %38 : vector<3x3x8xf32>
    %40 = vector.extract_strided_slice %0 {offsets = [0, 1, 0, 0], sizes = [1, 3, 3, 8], strides = [1, 1, 1, 1]} : vector<3x5x5x8xf32> to vector<1x3x3x8xf32>
    %41 = vector.shape_cast %40 : vector<1x3x3x8xf32> to vector<3x3x8xf32>
    %c3 = arith.constant 3 : index
    %42 = memref.load %arg1[%c3] : memref<90xf32, #tpu.memory_space<smem>>
    %43 = vector.broadcast %42 : f32 to vector<3x3x8xf32>
    %44 = arith.mulf %41, %43 : vector<3x3x8xf32>
    %45 = arith.addf %31, %44 : vector<3x3x8xf32>
    %c30 = arith.constant 30 : index
    %46 = memref.load %arg1[%c30] : memref<90xf32, #tpu.memory_space<smem>>
    %47 = vector.broadcast %46 : f32 to vector<3x3x8xf32>
    %48 = arith.mulf %41, %47 : vector<3x3x8xf32>
    %49 = arith.addf %35, %48 : vector<3x3x8xf32>
    %c57 = arith.constant 57 : index
    %50 = memref.load %arg1[%c57] : memref<90xf32, #tpu.memory_space<smem>>
    %51 = vector.broadcast %50 : f32 to vector<3x3x8xf32>
    %52 = arith.mulf %41, %51 : vector<3x3x8xf32>
    %53 = arith.addf %39, %52 : vector<3x3x8xf32>
    %54 = vector.extract_strided_slice %0 {offsets = [0, 1, 1, 0], sizes = [1, 3, 3, 8], strides = [1, 1, 1, 1]} : vector<3x5x5x8xf32> to vector<1x3x3x8xf32>
    %55 = vector.shape_cast %54 : vector<1x3x3x8xf32> to vector<3x3x8xf32>
    %c4 = arith.constant 4 : index
    %56 = memref.load %arg1[%c4] : memref<90xf32, #tpu.memory_space<smem>>
    %57 = vector.broadcast %56 : f32 to vector<3x3x8xf32>
    %58 = arith.mulf %55, %57 : vector<3x3x8xf32>
    %59 = arith.addf %45, %58 : vector<3x3x8xf32>
    %c31 = arith.constant 31 : index
    %60 = memref.load %arg1[%c31] : memref<90xf32, #tpu.memory_space<smem>>
    %61 = vector.broadcast %60 : f32 to vector<3x3x8xf32>
    %62 = arith.mulf %55, %61 : vector<3x3x8xf32>
    %63 = arith.addf %49, %62 : vector<3x3x8xf32>
    %c58 = arith.constant 58 : index
    %64 = memref.load %arg1[%c58] : memref<90xf32, #tpu.memory_space<smem>>
    %65 = vector.broadcast %64 : f32 to vector<3x3x8xf32>
    %66 = arith.mulf %55, %65 : vector<3x3x8xf32>
    %67 = arith.addf %53, %66 : vector<3x3x8xf32>
    %68 = vector.extract_strided_slice %0 {offsets = [0, 1, 2, 0], sizes = [1, 3, 3, 8], strides = [1, 1, 1, 1]} : vector<3x5x5x8xf32> to vector<1x3x3x8xf32>
    %69 = vector.shape_cast %68 : vector<1x3x3x8xf32> to vector<3x3x8xf32>
    %c5 = arith.constant 5 : index
    %70 = memref.load %arg1[%c5] : memref<90xf32, #tpu.memory_space<smem>>
    %71 = vector.broadcast %70 : f32 to vector<3x3x8xf32>
    %72 = arith.mulf %69, %71 : vector<3x3x8xf32>
    %73 = arith.addf %59, %72 : vector<3x3x8xf32>
    %c32 = arith.constant 32 : index
    %74 = memref.load %arg1[%c32] : memref<90xf32, #tpu.memory_space<smem>>
    %75 = vector.broadcast %74 : f32 to vector<3x3x8xf32>
    %76 = arith.mulf %69, %75 : vector<3x3x8xf32>
    %77 = arith.addf %63, %76 : vector<3x3x8xf32>
    %c59 = arith.constant 59 : index
    %78 = memref.load %arg1[%c59] : memref<90xf32, #tpu.memory_space<smem>>
    %79 = vector.broadcast %78 : f32 to vector<3x3x8xf32>
    %80 = arith.mulf %69, %79 : vector<3x3x8xf32>
    %81 = arith.addf %67, %80 : vector<3x3x8xf32>
    %82 = vector.extract_strided_slice %0 {offsets = [0, 2, 0, 0], sizes = [1, 3, 3, 8], strides = [1, 1, 1, 1]} : vector<3x5x5x8xf32> to vector<1x3x3x8xf32>
    %83 = vector.shape_cast %82 : vector<1x3x3x8xf32> to vector<3x3x8xf32>
    %c6 = arith.constant 6 : index
    %84 = memref.load %arg1[%c6] : memref<90xf32, #tpu.memory_space<smem>>
    %85 = vector.broadcast %84 : f32 to vector<3x3x8xf32>
    %86 = arith.mulf %83, %85 : vector<3x3x8xf32>
    %87 = arith.addf %73, %86 : vector<3x3x8xf32>
    %c33 = arith.constant 33 : index
    %88 = memref.load %arg1[%c33] : memref<90xf32, #tpu.memory_space<smem>>
    %89 = vector.broadcast %88 : f32 to vector<3x3x8xf32>
    %90 = arith.mulf %83, %89 : vector<3x3x8xf32>
    %91 = arith.addf %77, %90 : vector<3x3x8xf32>
    %c60 = arith.constant 60 : index
    %92 = memref.load %arg1[%c60] : memref<90xf32, #tpu.memory_space<smem>>
    %93 = vector.broadcast %92 : f32 to vector<3x3x8xf32>
    %94 = arith.mulf %83, %93 : vector<3x3x8xf32>
    %95 = arith.addf %81, %94 : vector<3x3x8xf32>
    %96 = vector.extract_strided_slice %0 {offsets = [0, 2, 1, 0], sizes = [1, 3, 3, 8], strides = [1, 1, 1, 1]} : vector<3x5x5x8xf32> to vector<1x3x3x8xf32>
    %97 = vector.shape_cast %96 : vector<1x3x3x8xf32> to vector<3x3x8xf32>
    %c7 = arith.constant 7 : index
    %98 = memref.load %arg1[%c7] : memref<90xf32, #tpu.memory_space<smem>>
    %99 = vector.broadcast %98 : f32 to vector<3x3x8xf32>
    %100 = arith.mulf %97, %99 : vector<3x3x8xf32>
    %101 = arith.addf %87, %100 : vector<3x3x8xf32>
    %c34 = arith.constant 34 : index
    %102 = memref.load %arg1[%c34] : memref<90xf32, #tpu.memory_space<smem>>
    %103 = vector.broadcast %102 : f32 to vector<3x3x8xf32>
    %104 = arith.mulf %97, %103 : vector<3x3x8xf32>
    %105 = arith.addf %91, %104 : vector<3x3x8xf32>
    %c61 = arith.constant 61 : index
    %106 = memref.load %arg1[%c61] : memref<90xf32, #tpu.memory_space<smem>>
    %107 = vector.broadcast %106 : f32 to vector<3x3x8xf32>
    %108 = arith.mulf %97, %107 : vector<3x3x8xf32>
    %109 = arith.addf %95, %108 : vector<3x3x8xf32>
    %110 = vector.extract_strided_slice %0 {offsets = [0, 2, 2, 0], sizes = [1, 3, 3, 8], strides = [1, 1, 1, 1]} : vector<3x5x5x8xf32> to vector<1x3x3x8xf32>
    %111 = vector.shape_cast %110 : vector<1x3x3x8xf32> to vector<3x3x8xf32>
    %c8 = arith.constant 8 : index
    %112 = memref.load %arg1[%c8] : memref<90xf32, #tpu.memory_space<smem>>
    %113 = vector.broadcast %112 : f32 to vector<3x3x8xf32>
    %114 = arith.mulf %111, %113 : vector<3x3x8xf32>
    %115 = arith.addf %101, %114 : vector<3x3x8xf32>
    %c35 = arith.constant 35 : index
    %116 = memref.load %arg1[%c35] : memref<90xf32, #tpu.memory_space<smem>>
    %117 = vector.broadcast %116 : f32 to vector<3x3x8xf32>
    %118 = arith.mulf %111, %117 : vector<3x3x8xf32>
    %119 = arith.addf %105, %118 : vector<3x3x8xf32>
    %c62 = arith.constant 62 : index
    %120 = memref.load %arg1[%c62] : memref<90xf32, #tpu.memory_space<smem>>
    %121 = vector.broadcast %120 : f32 to vector<3x3x8xf32>
    %122 = arith.mulf %111, %121 : vector<3x3x8xf32>
    %123 = arith.addf %109, %122 : vector<3x3x8xf32>
    %124 = vector.extract_strided_slice %0 {offsets = [1, 0, 0, 0], sizes = [1, 3, 3, 8], strides = [1, 1, 1, 1]} : vector<3x5x5x8xf32> to vector<1x3x3x8xf32>
    %125 = vector.shape_cast %124 : vector<1x3x3x8xf32> to vector<3x3x8xf32>
    %c9 = arith.constant 9 : index
    %126 = memref.load %arg1[%c9] : memref<90xf32, #tpu.memory_space<smem>>
    %127 = vector.broadcast %126 : f32 to vector<3x3x8xf32>
    %128 = arith.mulf %125, %127 : vector<3x3x8xf32>
    %129 = arith.addf %115, %128 : vector<3x3x8xf32>
    %c36 = arith.constant 36 : index
    %130 = memref.load %arg1[%c36] : memref<90xf32, #tpu.memory_space<smem>>
    %131 = vector.broadcast %130 : f32 to vector<3x3x8xf32>
    %132 = arith.mulf %125, %131 : vector<3x3x8xf32>
    %133 = arith.addf %119, %132 : vector<3x3x8xf32>
    %c63 = arith.constant 63 : index
    %134 = memref.load %arg1[%c63] : memref<90xf32, #tpu.memory_space<smem>>
    %135 = vector.broadcast %134 : f32 to vector<3x3x8xf32>
    %136 = arith.mulf %125, %135 : vector<3x3x8xf32>
    %137 = arith.addf %123, %136 : vector<3x3x8xf32>
    %138 = vector.extract_strided_slice %0 {offsets = [1, 0, 1, 0], sizes = [1, 3, 3, 8], strides = [1, 1, 1, 1]} : vector<3x5x5x8xf32> to vector<1x3x3x8xf32>
    %139 = vector.shape_cast %138 : vector<1x3x3x8xf32> to vector<3x3x8xf32>
    %c10 = arith.constant 10 : index
    %140 = memref.load %arg1[%c10] : memref<90xf32, #tpu.memory_space<smem>>
    %141 = vector.broadcast %140 : f32 to vector<3x3x8xf32>
    %142 = arith.mulf %139, %141 : vector<3x3x8xf32>
    %143 = arith.addf %129, %142 : vector<3x3x8xf32>
    %c37 = arith.constant 37 : index
    %144 = memref.load %arg1[%c37] : memref<90xf32, #tpu.memory_space<smem>>
    %145 = vector.broadcast %144 : f32 to vector<3x3x8xf32>
    %146 = arith.mulf %139, %145 : vector<3x3x8xf32>
    %147 = arith.addf %133, %146 : vector<3x3x8xf32>
    %c64 = arith.constant 64 : index
    %148 = memref.load %arg1[%c64] : memref<90xf32, #tpu.memory_space<smem>>
    %149 = vector.broadcast %148 : f32 to vector<3x3x8xf32>
    %150 = arith.mulf %139, %149 : vector<3x3x8xf32>
    %151 = arith.addf %137, %150 : vector<3x3x8xf32>
    %152 = vector.extract_strided_slice %0 {offsets = [1, 0, 2, 0], sizes = [1, 3, 3, 8], strides = [1, 1, 1, 1]} : vector<3x5x5x8xf32> to vector<1x3x3x8xf32>
    %153 = vector.shape_cast %152 : vector<1x3x3x8xf32> to vector<3x3x8xf32>
    %c11 = arith.constant 11 : index
    %154 = memref.load %arg1[%c11] : memref<90xf32, #tpu.memory_space<smem>>
    %155 = vector.broadcast %154 : f32 to vector<3x3x8xf32>
    %156 = arith.mulf %153, %155 : vector<3x3x8xf32>
    %157 = arith.addf %143, %156 : vector<3x3x8xf32>
    %c38 = arith.constant 38 : index
    %158 = memref.load %arg1[%c38] : memref<90xf32, #tpu.memory_space<smem>>
    %159 = vector.broadcast %158 : f32 to vector<3x3x8xf32>
    %160 = arith.mulf %153, %159 : vector<3x3x8xf32>
    %161 = arith.addf %147, %160 : vector<3x3x8xf32>
    %c65 = arith.constant 65 : index
    %162 = memref.load %arg1[%c65] : memref<90xf32, #tpu.memory_space<smem>>
    %163 = vector.broadcast %162 : f32 to vector<3x3x8xf32>
    %164 = arith.mulf %153, %163 : vector<3x3x8xf32>
    %165 = arith.addf %151, %164 : vector<3x3x8xf32>
    %166 = vector.extract_strided_slice %0 {offsets = [1, 1, 0, 0], sizes = [1, 3, 3, 8], strides = [1, 1, 1, 1]} : vector<3x5x5x8xf32> to vector<1x3x3x8xf32>
    %167 = vector.shape_cast %166 : vector<1x3x3x8xf32> to vector<3x3x8xf32>
    %c12 = arith.constant 12 : index
    %168 = memref.load %arg1[%c12] : memref<90xf32, #tpu.memory_space<smem>>
    %169 = vector.broadcast %168 : f32 to vector<3x3x8xf32>
    %170 = arith.mulf %167, %169 : vector<3x3x8xf32>
    %171 = arith.addf %157, %170 : vector<3x3x8xf32>
    %c39 = arith.constant 39 : index
    %172 = memref.load %arg1[%c39] : memref<90xf32, #tpu.memory_space<smem>>
    %173 = vector.broadcast %172 : f32 to vector<3x3x8xf32>
    %174 = arith.mulf %167, %173 : vector<3x3x8xf32>
    %175 = arith.addf %161, %174 : vector<3x3x8xf32>
    %c66 = arith.constant 66 : index
    %176 = memref.load %arg1[%c66] : memref<90xf32, #tpu.memory_space<smem>>
    %177 = vector.broadcast %176 : f32 to vector<3x3x8xf32>
    %178 = arith.mulf %167, %177 : vector<3x3x8xf32>
    %179 = arith.addf %165, %178 : vector<3x3x8xf32>
    %180 = vector.extract_strided_slice %0 {offsets = [1, 1, 1, 0], sizes = [1, 3, 3, 8], strides = [1, 1, 1, 1]} : vector<3x5x5x8xf32> to vector<1x3x3x8xf32>
    %181 = vector.shape_cast %180 : vector<1x3x3x8xf32> to vector<3x3x8xf32>
    %c13 = arith.constant 13 : index
    %182 = memref.load %arg1[%c13] : memref<90xf32, #tpu.memory_space<smem>>
    %183 = vector.broadcast %182 : f32 to vector<3x3x8xf32>
    %184 = arith.mulf %181, %183 : vector<3x3x8xf32>
    %185 = arith.addf %171, %184 : vector<3x3x8xf32>
    %c40 = arith.constant 40 : index
    %186 = memref.load %arg1[%c40] : memref<90xf32, #tpu.memory_space<smem>>
    %187 = vector.broadcast %186 : f32 to vector<3x3x8xf32>
    %188 = arith.mulf %181, %187 : vector<3x3x8xf32>
    %189 = arith.addf %175, %188 : vector<3x3x8xf32>
    %c67 = arith.constant 67 : index
    %190 = memref.load %arg1[%c67] : memref<90xf32, #tpu.memory_space<smem>>
    %191 = vector.broadcast %190 : f32 to vector<3x3x8xf32>
    %192 = arith.mulf %181, %191 : vector<3x3x8xf32>
    %193 = arith.addf %179, %192 : vector<3x3x8xf32>
    %194 = vector.extract_strided_slice %0 {offsets = [1, 1, 2, 0], sizes = [1, 3, 3, 8], strides = [1, 1, 1, 1]} : vector<3x5x5x8xf32> to vector<1x3x3x8xf32>
    %195 = vector.shape_cast %194 : vector<1x3x3x8xf32> to vector<3x3x8xf32>
    %c14 = arith.constant 14 : index
    %196 = memref.load %arg1[%c14] : memref<90xf32, #tpu.memory_space<smem>>
    %197 = vector.broadcast %196 : f32 to vector<3x3x8xf32>
    %198 = arith.mulf %195, %197 : vector<3x3x8xf32>
    %199 = arith.addf %185, %198 : vector<3x3x8xf32>
    %c41 = arith.constant 41 : index
    %200 = memref.load %arg1[%c41] : memref<90xf32, #tpu.memory_space<smem>>
    %201 = vector.broadcast %200 : f32 to vector<3x3x8xf32>
    %202 = arith.mulf %195, %201 : vector<3x3x8xf32>
    %203 = arith.addf %189, %202 : vector<3x3x8xf32>
    %c68 = arith.constant 68 : index
    %204 = memref.load %arg1[%c68] : memref<90xf32, #tpu.memory_space<smem>>
    %205 = vector.broadcast %204 : f32 to vector<3x3x8xf32>
    %206 = arith.mulf %195, %205 : vector<3x3x8xf32>
    %207 = arith.addf %193, %206 : vector<3x3x8xf32>
    %208 = vector.extract_strided_slice %0 {offsets = [1, 2, 0, 0], sizes = [1, 3, 3, 8], strides = [1, 1, 1, 1]} : vector<3x5x5x8xf32> to vector<1x3x3x8xf32>
    %209 = vector.shape_cast %208 : vector<1x3x3x8xf32> to vector<3x3x8xf32>
    %c15 = arith.constant 15 : index
    %210 = memref.load %arg1[%c15] : memref<90xf32, #tpu.memory_space<smem>>
    %211 = vector.broadcast %210 : f32 to vector<3x3x8xf32>
    %212 = arith.mulf %209, %211 : vector<3x3x8xf32>
    %213 = arith.addf %199, %212 : vector<3x3x8xf32>
    %c42 = arith.constant 42 : index
    %214 = memref.load %arg1[%c42] : memref<90xf32, #tpu.memory_space<smem>>
    %215 = vector.broadcast %214 : f32 to vector<3x3x8xf32>
    %216 = arith.mulf %209, %215 : vector<3x3x8xf32>
    %217 = arith.addf %203, %216 : vector<3x3x8xf32>
    %c69 = arith.constant 69 : index
    %218 = memref.load %arg1[%c69] : memref<90xf32, #tpu.memory_space<smem>>
    %219 = vector.broadcast %218 : f32 to vector<3x3x8xf32>
    %220 = arith.mulf %209, %219 : vector<3x3x8xf32>
    %221 = arith.addf %207, %220 : vector<3x3x8xf32>
    %222 = vector.extract_strided_slice %0 {offsets = [1, 2, 1, 0], sizes = [1, 3, 3, 8], strides = [1, 1, 1, 1]} : vector<3x5x5x8xf32> to vector<1x3x3x8xf32>
    %223 = vector.shape_cast %222 : vector<1x3x3x8xf32> to vector<3x3x8xf32>
    %c16 = arith.constant 16 : index
    %224 = memref.load %arg1[%c16] : memref<90xf32, #tpu.memory_space<smem>>
    %225 = vector.broadcast %224 : f32 to vector<3x3x8xf32>
    %226 = arith.mulf %223, %225 : vector<3x3x8xf32>
    %227 = arith.addf %213, %226 : vector<3x3x8xf32>
    %c43 = arith.constant 43 : index
    %228 = memref.load %arg1[%c43] : memref<90xf32, #tpu.memory_space<smem>>
    %229 = vector.broadcast %228 : f32 to vector<3x3x8xf32>
    %230 = arith.mulf %223, %229 : vector<3x3x8xf32>
    %231 = arith.addf %217, %230 : vector<3x3x8xf32>
    %c70 = arith.constant 70 : index
    %232 = memref.load %arg1[%c70] : memref<90xf32, #tpu.memory_space<smem>>
    %233 = vector.broadcast %232 : f32 to vector<3x3x8xf32>
    %234 = arith.mulf %223, %233 : vector<3x3x8xf32>
    %235 = arith.addf %221, %234 : vector<3x3x8xf32>
    %236 = vector.extract_strided_slice %0 {offsets = [1, 2, 2, 0], sizes = [1, 3, 3, 8], strides = [1, 1, 1, 1]} : vector<3x5x5x8xf32> to vector<1x3x3x8xf32>
    %237 = vector.shape_cast %236 : vector<1x3x3x8xf32> to vector<3x3x8xf32>
    %c17 = arith.constant 17 : index
    %238 = memref.load %arg1[%c17] : memref<90xf32, #tpu.memory_space<smem>>
    %239 = vector.broadcast %238 : f32 to vector<3x3x8xf32>
    %240 = arith.mulf %237, %239 : vector<3x3x8xf32>
    %241 = arith.addf %227, %240 : vector<3x3x8xf32>
    %c44 = arith.constant 44 : index
    %242 = memref.load %arg1[%c44] : memref<90xf32, #tpu.memory_space<smem>>
    %243 = vector.broadcast %242 : f32 to vector<3x3x8xf32>
    %244 = arith.mulf %237, %243 : vector<3x3x8xf32>
    %245 = arith.addf %231, %244 : vector<3x3x8xf32>
    %c71 = arith.constant 71 : index
    %246 = memref.load %arg1[%c71] : memref<90xf32, #tpu.memory_space<smem>>
    %247 = vector.broadcast %246 : f32 to vector<3x3x8xf32>
    %248 = arith.mulf %237, %247 : vector<3x3x8xf32>
    %249 = arith.addf %235, %248 : vector<3x3x8xf32>
    %250 = vector.extract_strided_slice %0 {offsets = [2, 0, 0, 0], sizes = [1, 3, 3, 8], strides = [1, 1, 1, 1]} : vector<3x5x5x8xf32> to vector<1x3x3x8xf32>
    %251 = vector.shape_cast %250 : vector<1x3x3x8xf32> to vector<3x3x8xf32>
    %c18 = arith.constant 18 : index
    %252 = memref.load %arg1[%c18] : memref<90xf32, #tpu.memory_space<smem>>
    %253 = vector.broadcast %252 : f32 to vector<3x3x8xf32>
    %254 = arith.mulf %251, %253 : vector<3x3x8xf32>
    %255 = arith.addf %241, %254 : vector<3x3x8xf32>
    %c45 = arith.constant 45 : index
    %256 = memref.load %arg1[%c45] : memref<90xf32, #tpu.memory_space<smem>>
    %257 = vector.broadcast %256 : f32 to vector<3x3x8xf32>
    %258 = arith.mulf %251, %257 : vector<3x3x8xf32>
    %259 = arith.addf %245, %258 : vector<3x3x8xf32>
    %c72 = arith.constant 72 : index
    %260 = memref.load %arg1[%c72] : memref<90xf32, #tpu.memory_space<smem>>
    %261 = vector.broadcast %260 : f32 to vector<3x3x8xf32>
    %262 = arith.mulf %251, %261 : vector<3x3x8xf32>
    %263 = arith.addf %249, %262 : vector<3x3x8xf32>
    %264 = vector.extract_strided_slice %0 {offsets = [2, 0, 1, 0], sizes = [1, 3, 3, 8], strides = [1, 1, 1, 1]} : vector<3x5x5x8xf32> to vector<1x3x3x8xf32>
    %265 = vector.shape_cast %264 : vector<1x3x3x8xf32> to vector<3x3x8xf32>
    %c19 = arith.constant 19 : index
    %266 = memref.load %arg1[%c19] : memref<90xf32, #tpu.memory_space<smem>>
    %267 = vector.broadcast %266 : f32 to vector<3x3x8xf32>
    %268 = arith.mulf %265, %267 : vector<3x3x8xf32>
    %269 = arith.addf %255, %268 : vector<3x3x8xf32>
    %c46 = arith.constant 46 : index
    %270 = memref.load %arg1[%c46] : memref<90xf32, #tpu.memory_space<smem>>
    %271 = vector.broadcast %270 : f32 to vector<3x3x8xf32>
    %272 = arith.mulf %265, %271 : vector<3x3x8xf32>
    %273 = arith.addf %259, %272 : vector<3x3x8xf32>
    %c73 = arith.constant 73 : index
    %274 = memref.load %arg1[%c73] : memref<90xf32, #tpu.memory_space<smem>>
    %275 = vector.broadcast %274 : f32 to vector<3x3x8xf32>
    %276 = arith.mulf %265, %275 : vector<3x3x8xf32>
    %277 = arith.addf %263, %276 : vector<3x3x8xf32>
    %278 = vector.extract_strided_slice %0 {offsets = [2, 0, 2, 0], sizes = [1, 3, 3, 8], strides = [1, 1, 1, 1]} : vector<3x5x5x8xf32> to vector<1x3x3x8xf32>
    %279 = vector.shape_cast %278 : vector<1x3x3x8xf32> to vector<3x3x8xf32>
    %c20 = arith.constant 20 : index
    %280 = memref.load %arg1[%c20] : memref<90xf32, #tpu.memory_space<smem>>
    %281 = vector.broadcast %280 : f32 to vector<3x3x8xf32>
    %282 = arith.mulf %279, %281 : vector<3x3x8xf32>
    %283 = arith.addf %269, %282 : vector<3x3x8xf32>
    %c47 = arith.constant 47 : index
    %284 = memref.load %arg1[%c47] : memref<90xf32, #tpu.memory_space<smem>>
    %285 = vector.broadcast %284 : f32 to vector<3x3x8xf32>
    %286 = arith.mulf %279, %285 : vector<3x3x8xf32>
    %287 = arith.addf %273, %286 : vector<3x3x8xf32>
    %c74 = arith.constant 74 : index
    %288 = memref.load %arg1[%c74] : memref<90xf32, #tpu.memory_space<smem>>
    %289 = vector.broadcast %288 : f32 to vector<3x3x8xf32>
    %290 = arith.mulf %279, %289 : vector<3x3x8xf32>
    %291 = arith.addf %277, %290 : vector<3x3x8xf32>
    %292 = vector.extract_strided_slice %0 {offsets = [2, 1, 0, 0], sizes = [1, 3, 3, 8], strides = [1, 1, 1, 1]} : vector<3x5x5x8xf32> to vector<1x3x3x8xf32>
    %293 = vector.shape_cast %292 : vector<1x3x3x8xf32> to vector<3x3x8xf32>
    %c21 = arith.constant 21 : index
    %294 = memref.load %arg1[%c21] : memref<90xf32, #tpu.memory_space<smem>>
    %295 = vector.broadcast %294 : f32 to vector<3x3x8xf32>
    %296 = arith.mulf %293, %295 : vector<3x3x8xf32>
    %297 = arith.addf %283, %296 : vector<3x3x8xf32>
    %c48 = arith.constant 48 : index
    %298 = memref.load %arg1[%c48] : memref<90xf32, #tpu.memory_space<smem>>
    %299 = vector.broadcast %298 : f32 to vector<3x3x8xf32>
    %300 = arith.mulf %293, %299 : vector<3x3x8xf32>
    %301 = arith.addf %287, %300 : vector<3x3x8xf32>
    %c75 = arith.constant 75 : index
    %302 = memref.load %arg1[%c75] : memref<90xf32, #tpu.memory_space<smem>>
    %303 = vector.broadcast %302 : f32 to vector<3x3x8xf32>
    %304 = arith.mulf %293, %303 : vector<3x3x8xf32>
    %305 = arith.addf %291, %304 : vector<3x3x8xf32>
    %306 = vector.extract_strided_slice %0 {offsets = [2, 1, 1, 0], sizes = [1, 3, 3, 8], strides = [1, 1, 1, 1]} : vector<3x5x5x8xf32> to vector<1x3x3x8xf32>
    %307 = vector.shape_cast %306 : vector<1x3x3x8xf32> to vector<3x3x8xf32>
    %c22 = arith.constant 22 : index
    %308 = memref.load %arg1[%c22] : memref<90xf32, #tpu.memory_space<smem>>
    %309 = vector.broadcast %308 : f32 to vector<3x3x8xf32>
    %310 = arith.mulf %307, %309 : vector<3x3x8xf32>
    %311 = arith.addf %297, %310 : vector<3x3x8xf32>
    %c49 = arith.constant 49 : index
    %312 = memref.load %arg1[%c49] : memref<90xf32, #tpu.memory_space<smem>>
    %313 = vector.broadcast %312 : f32 to vector<3x3x8xf32>
    %314 = arith.mulf %307, %313 : vector<3x3x8xf32>
    %315 = arith.addf %301, %314 : vector<3x3x8xf32>
    %c76 = arith.constant 76 : index
    %316 = memref.load %arg1[%c76] : memref<90xf32, #tpu.memory_space<smem>>
    %317 = vector.broadcast %316 : f32 to vector<3x3x8xf32>
    %318 = arith.mulf %307, %317 : vector<3x3x8xf32>
    %319 = arith.addf %305, %318 : vector<3x3x8xf32>
    %320 = vector.extract_strided_slice %0 {offsets = [2, 1, 2, 0], sizes = [1, 3, 3, 8], strides = [1, 1, 1, 1]} : vector<3x5x5x8xf32> to vector<1x3x3x8xf32>
    %321 = vector.shape_cast %320 : vector<1x3x3x8xf32> to vector<3x3x8xf32>
    %c23 = arith.constant 23 : index
    %322 = memref.load %arg1[%c23] : memref<90xf32, #tpu.memory_space<smem>>
    %323 = vector.broadcast %322 : f32 to vector<3x3x8xf32>
    %324 = arith.mulf %321, %323 : vector<3x3x8xf32>
    %325 = arith.addf %311, %324 : vector<3x3x8xf32>
    %c50 = arith.constant 50 : index
    %326 = memref.load %arg1[%c50] : memref<90xf32, #tpu.memory_space<smem>>
    %327 = vector.broadcast %326 : f32 to vector<3x3x8xf32>
    %328 = arith.mulf %321, %327 : vector<3x3x8xf32>
    %329 = arith.addf %315, %328 : vector<3x3x8xf32>
    %c77 = arith.constant 77 : index
    %330 = memref.load %arg1[%c77] : memref<90xf32, #tpu.memory_space<smem>>
    %331 = vector.broadcast %330 : f32 to vector<3x3x8xf32>
    %332 = arith.mulf %321, %331 : vector<3x3x8xf32>
    %333 = arith.addf %319, %332 : vector<3x3x8xf32>
    %334 = vector.extract_strided_slice %0 {offsets = [2, 2, 0, 0], sizes = [1, 3, 3, 8], strides = [1, 1, 1, 1]} : vector<3x5x5x8xf32> to vector<1x3x3x8xf32>
    %335 = vector.shape_cast %334 : vector<1x3x3x8xf32> to vector<3x3x8xf32>
    %c24 = arith.constant 24 : index
    %336 = memref.load %arg1[%c24] : memref<90xf32, #tpu.memory_space<smem>>
    %337 = vector.broadcast %336 : f32 to vector<3x3x8xf32>
    %338 = arith.mulf %335, %337 : vector<3x3x8xf32>
    %339 = arith.addf %325, %338 : vector<3x3x8xf32>
    %c51 = arith.constant 51 : index
    %340 = memref.load %arg1[%c51] : memref<90xf32, #tpu.memory_space<smem>>
    %341 = vector.broadcast %340 : f32 to vector<3x3x8xf32>
    %342 = arith.mulf %335, %341 : vector<3x3x8xf32>
    %343 = arith.addf %329, %342 : vector<3x3x8xf32>
    %c78 = arith.constant 78 : index
    %344 = memref.load %arg1[%c78] : memref<90xf32, #tpu.memory_space<smem>>
    %345 = vector.broadcast %344 : f32 to vector<3x3x8xf32>
    %346 = arith.mulf %335, %345 : vector<3x3x8xf32>
    %347 = arith.addf %333, %346 : vector<3x3x8xf32>
    %348 = vector.extract_strided_slice %0 {offsets = [2, 2, 1, 0], sizes = [1, 3, 3, 8], strides = [1, 1, 1, 1]} : vector<3x5x5x8xf32> to vector<1x3x3x8xf32>
    %349 = vector.shape_cast %348 : vector<1x3x3x8xf32> to vector<3x3x8xf32>
    %c25 = arith.constant 25 : index
    %350 = memref.load %arg1[%c25] : memref<90xf32, #tpu.memory_space<smem>>
    %351 = vector.broadcast %350 : f32 to vector<3x3x8xf32>
    %352 = arith.mulf %349, %351 : vector<3x3x8xf32>
    %353 = arith.addf %339, %352 : vector<3x3x8xf32>
    %c52 = arith.constant 52 : index
    %354 = memref.load %arg1[%c52] : memref<90xf32, #tpu.memory_space<smem>>
    %355 = vector.broadcast %354 : f32 to vector<3x3x8xf32>
    %356 = arith.mulf %349, %355 : vector<3x3x8xf32>
    %357 = arith.addf %343, %356 : vector<3x3x8xf32>
    %c79 = arith.constant 79 : index
    %358 = memref.load %arg1[%c79] : memref<90xf32, #tpu.memory_space<smem>>
    %359 = vector.broadcast %358 : f32 to vector<3x3x8xf32>
    %360 = arith.mulf %349, %359 : vector<3x3x8xf32>
    %361 = arith.addf %347, %360 : vector<3x3x8xf32>
    %362 = vector.extract_strided_slice %0 {offsets = [2, 2, 2, 0], sizes = [1, 3, 3, 8], strides = [1, 1, 1, 1]} : vector<3x5x5x8xf32> to vector<1x3x3x8xf32>
    %363 = vector.shape_cast %362 : vector<1x3x3x8xf32> to vector<3x3x8xf32>
    %c26 = arith.constant 26 : index
    %364 = memref.load %arg1[%c26] : memref<90xf32, #tpu.memory_space<smem>>
    %365 = vector.broadcast %364 : f32 to vector<3x3x8xf32>
    %366 = arith.mulf %363, %365 : vector<3x3x8xf32>
    %367 = arith.addf %353, %366 : vector<3x3x8xf32>
    %c53 = arith.constant 53 : index
    %368 = memref.load %arg1[%c53] : memref<90xf32, #tpu.memory_space<smem>>
    %369 = vector.broadcast %368 : f32 to vector<3x3x8xf32>
    %370 = arith.mulf %363, %369 : vector<3x3x8xf32>
    %371 = arith.addf %357, %370 : vector<3x3x8xf32>
    %c80 = arith.constant 80 : index
    %372 = memref.load %arg1[%c80] : memref<90xf32, #tpu.memory_space<smem>>
    %373 = vector.broadcast %372 : f32 to vector<3x3x8xf32>
    %374 = arith.mulf %363, %373 : vector<3x3x8xf32>
    %375 = arith.addf %361, %374 : vector<3x3x8xf32>
    %c81 = arith.constant 81 : index
    %376 = memref.load %arg1[%c81] : memref<90xf32, #tpu.memory_space<smem>>
    %377 = vector.broadcast %376 : f32 to vector<3x3x8xf32>
    %378 = arith.addf %367, %377 : vector<3x3x8xf32>
    %379 = vector.shape_cast %378 : vector<3x3x8xf32> to vector<1x3x3x8xf32>
    %cst = arith.constant dense<0.000000e+00> : vector<1xf32>
    %380 = vector.multi_reduction <add>, %379, %cst [1, 2, 3] : vector<1x3x3x8xf32> to vector<1xf32>
    %381 = vector.shape_cast %380 : vector<1xf32> to vector<1x1x1x1xf32>
    %382 = vector.extract %381[0, 0, 0, 0] : f32 from vector<1x1x1x1xf32>
    %cst_4 = arith.constant 0.013888889 : f32
    %383 = arith.mulf %382, %cst_4 : f32
    %384 = vector.broadcast %383 : f32 to vector<3x3x8xf32>
    %385 = arith.subf %378, %384 : vector<3x3x8xf32>
    %386 = arith.mulf %385, %385 : vector<3x3x8xf32>
    %387 = vector.shape_cast %386 : vector<3x3x8xf32> to vector<1x3x3x8xf32>
    %cst_5 = arith.constant dense<0.000000e+00> : vector<1xf32>
    %388 = vector.multi_reduction <add>, %387, %cst_5 [1, 2, 3] : vector<1x3x3x8xf32> to vector<1xf32>
    %389 = vector.shape_cast %388 : vector<1xf32> to vector<1x1x1x1xf32>
    %390 = vector.extract %389[0, 0, 0, 0] : f32 from vector<1x1x1x1xf32>
    %cst_6 = arith.constant 0.013888889 : f32
    %391 = arith.mulf %390, %cst_6 : f32
    %cst_7 = arith.constant 9.99999974E-6 : f32
    %392 = arith.addf %391, %cst_7 : f32
    %393 = math.rsqrt %392 : f32
    %c84 = arith.constant 84 : index
    %394 = memref.load %arg1[%c84] : memref<90xf32, #tpu.memory_space<smem>>
    %395 = vector.broadcast %393 : f32 to vector<3x3x8xf32>
    %396 = arith.mulf %385, %395 : vector<3x3x8xf32>
    %397 = vector.broadcast %394 : f32 to vector<3x3x8xf32>
    %398 = arith.mulf %397, %396 : vector<3x3x8xf32>
    %c87 = arith.constant 87 : index
    %399 = memref.load %arg1[%c87] : memref<90xf32, #tpu.memory_space<smem>>
    %400 = vector.broadcast %399 : f32 to vector<3x3x8xf32>
    %401 = arith.addf %398, %400 : vector<3x3x8xf32>
    %c82 = arith.constant 82 : index
    %402 = memref.load %arg1[%c82] : memref<90xf32, #tpu.memory_space<smem>>
    %403 = vector.broadcast %402 : f32 to vector<3x3x8xf32>
    %404 = arith.addf %371, %403 : vector<3x3x8xf32>
    %405 = vector.shape_cast %404 : vector<3x3x8xf32> to vector<1x3x3x8xf32>
    %cst_8 = arith.constant dense<0.000000e+00> : vector<1xf32>
    %406 = vector.multi_reduction <add>, %405, %cst_8 [1, 2, 3] : vector<1x3x3x8xf32> to vector<1xf32>
    %407 = vector.shape_cast %406 : vector<1xf32> to vector<1x1x1x1xf32>
    %408 = vector.extract %407[0, 0, 0, 0] : f32 from vector<1x1x1x1xf32>
    %cst_9 = arith.constant 0.013888889 : f32
    %409 = arith.mulf %408, %cst_9 : f32
    %410 = vector.broadcast %409 : f32 to vector<3x3x8xf32>
    %411 = arith.subf %404, %410 : vector<3x3x8xf32>
    %412 = arith.mulf %411, %411 : vector<3x3x8xf32>
    %413 = vector.shape_cast %412 : vector<3x3x8xf32> to vector<1x3x3x8xf32>
    %cst_10 = arith.constant dense<0.000000e+00> : vector<1xf32>
    %414 = vector.multi_reduction <add>, %413, %cst_10 [1, 2, 3] : vector<1x3x3x8xf32> to vector<1xf32>
    %415 = vector.shape_cast %414 : vector<1xf32> to vector<1x1x1x1xf32>
    %416 = vector.extract %415[0, 0, 0, 0] : f32 from vector<1x1x1x1xf32>
    %cst_11 = arith.constant 0.013888889 : f32
    %417 = arith.mulf %416, %cst_11 : f32
    %cst_12 = arith.constant 9.99999974E-6 : f32
    %418 = arith.addf %417, %cst_12 : f32
    %419 = math.rsqrt %418 : f32
    %c85 = arith.constant 85 : index
    %420 = memref.load %arg1[%c85] : memref<90xf32, #tpu.memory_space<smem>>
    %421 = vector.broadcast %419 : f32 to vector<3x3x8xf32>
    %422 = arith.mulf %411, %421 : vector<3x3x8xf32>
    %423 = vector.broadcast %420 : f32 to vector<3x3x8xf32>
    %424 = arith.mulf %423, %422 : vector<3x3x8xf32>
    %c88 = arith.constant 88 : index
    %425 = memref.load %arg1[%c88] : memref<90xf32, #tpu.memory_space<smem>>
    %426 = vector.broadcast %425 : f32 to vector<3x3x8xf32>
    %427 = arith.addf %424, %426 : vector<3x3x8xf32>
    %c83 = arith.constant 83 : index
    %428 = memref.load %arg1[%c83] : memref<90xf32, #tpu.memory_space<smem>>
    %429 = vector.broadcast %428 : f32 to vector<3x3x8xf32>
    %430 = arith.addf %375, %429 : vector<3x3x8xf32>
    %431 = vector.shape_cast %430 : vector<3x3x8xf32> to vector<1x3x3x8xf32>
    %cst_13 = arith.constant dense<0.000000e+00> : vector<1xf32>
    %432 = vector.multi_reduction <add>, %431, %cst_13 [1, 2, 3] : vector<1x3x3x8xf32> to vector<1xf32>
    %433 = vector.shape_cast %432 : vector<1xf32> to vector<1x1x1x1xf32>
    %434 = vector.extract %433[0, 0, 0, 0] : f32 from vector<1x1x1x1xf32>
    %cst_14 = arith.constant 0.013888889 : f32
    %435 = arith.mulf %434, %cst_14 : f32
    %436 = vector.broadcast %435 : f32 to vector<3x3x8xf32>
    %437 = arith.subf %430, %436 : vector<3x3x8xf32>
    %438 = arith.mulf %437, %437 : vector<3x3x8xf32>
    %439 = vector.shape_cast %438 : vector<3x3x8xf32> to vector<1x3x3x8xf32>
    %cst_15 = arith.constant dense<0.000000e+00> : vector<1xf32>
    %440 = vector.multi_reduction <add>, %439, %cst_15 [1, 2, 3] : vector<1x3x3x8xf32> to vector<1xf32>
    %441 = vector.shape_cast %440 : vector<1xf32> to vector<1x1x1x1xf32>
    %442 = vector.extract %441[0, 0, 0, 0] : f32 from vector<1x1x1x1xf32>
    %cst_16 = arith.constant 0.013888889 : f32
    %443 = arith.mulf %442, %cst_16 : f32
    %cst_17 = arith.constant 9.99999974E-6 : f32
    %444 = arith.addf %443, %cst_17 : f32
    %445 = math.rsqrt %444 : f32
    %c86 = arith.constant 86 : index
    %446 = memref.load %arg1[%c86] : memref<90xf32, #tpu.memory_space<smem>>
    %447 = vector.broadcast %445 : f32 to vector<3x3x8xf32>
    %448 = arith.mulf %437, %447 : vector<3x3x8xf32>
    %449 = vector.broadcast %446 : f32 to vector<3x3x8xf32>
    %450 = arith.mulf %449, %448 : vector<3x3x8xf32>
    %c89 = arith.constant 89 : index
    %451 = memref.load %arg1[%c89] : memref<90xf32, #tpu.memory_space<smem>>
    %452 = vector.broadcast %451 : f32 to vector<3x3x8xf32>
    %453 = arith.addf %450, %452 : vector<3x3x8xf32>
    %454 = vector.shape_cast %401 : vector<3x3x8xf32> to vector<1x3x3x8xf32>
    %455 = vector.shape_cast %427 : vector<3x3x8xf32> to vector<1x3x3x8xf32>
    %456 = vector.shape_cast %453 : vector<3x3x8xf32> to vector<1x3x3x8xf32>
    %457 = tpu.concatenate %454, %455, %456 in 0 : vector<1x3x3x8xf32>, vector<1x3x3x8xf32>, vector<1x3x3x8xf32> -> vector<3x3x3x8xf32>
    %c0_18 = arith.constant 0 : index
    %c0_19 = arith.constant 0 : index
    %c0_20 = arith.constant 0 : index
    %c0_21 = arith.constant 0 : index
    %458 = vector.load %arg2[%c0_18, %c0_19, %c0_20, %c0_21] : memref<3x3x3x8xf32, #tpu.memory_space<vmem>>, vector<3x3x3x8xf32>
    tpu.vector_store %arg2[%c0_18, %c0_19, %c0_20, %c0_21], %457 {strides = array<i32>} : memref<3x3x3x8xf32, #tpu.memory_space<vmem>>, vector<3x3x3x8xf32>,
    return
  }
}

</mosaic_0001>

<llo_original>
// kernel: model_forward.1
$region0: #{model_forward.1}
  #allocation0 [shape = 'u32[]', space=smem, size = 0x4, offset = 0x4, fixed_abs, tag = 'smem constant byte address 0x4 - core index']
  #allocation1 [shape = 'u32[144,128]{1,0:T(1,128)}', space=vmem, size = 0x12000, scoped, tag = 'internal scratch']
  %s0 = inlined_call_operand.vmem [shape: f32[3,5,5,8], index: 0, kind: input, shape index: {}]
  %s1 = inlined_call_operand.vmem [shape: f32[90], index: 1, kind: input, shape index: {}]
  %s2 = inlined_call_operand.hbm [shape: f32[3,3,3,8], index: 2, kind: output, shape index: {}]
  %s3 = sld [smem:[#allocation0]]
  $region22: #{model_forward.1} parent=0
    _
  %s5 = ssub.s32 1, %s3
  %s6 = scalar_select 0, %s5, %s3
  $region1: #{model_forward.1} parent=0
    #allocation2 [shape = 'u8[512]{0}', space=smem, size = 0x200, scoped, tag = 'input window, operand 1, single buffered']
    #allocation3 [shape = 's32[1]{0}', space=sflag, size = 0x4, scoped, tag = 'scoped memory for model_forward.1']
    #allocation4 [shape = 's32[1]{0}', space=sflag, size = 0x4, scoped, tag = 'scoped memory for model_forward.1']
    #allocation5 [shape = 'u8[18432]{0}', space=vmem, size = 0x4800, scoped, tag = 'output window, operand 0, single buffered']
    %7 = vsyncpa [#allocation4], 0
    %8 = vsyncpa [#allocation3], 0
    // Predicated region
    $region2: #{model_forward.1} parent=1 // pred_check
      _
    $region3: #{model_forward.1} parent=1 // pred_check_branch
      %10 = sbr.rel (0) target = $region5
    $region4: #{model_forward.1} parent=1 // pred_region
      _
    $region5: #{model_forward.1} parent=1 // pred_fallthru
      _
    // Predicated region
    $region6: #{model_forward.1} parent=1 // pred_check
      _
    $region7: #{model_forward.1} parent=1 // pred_check_branch
      %12 = sbr.rel (0) target = $region9
    $region8: #{model_forward.1} parent=1 // pred_region
      %s14 = ssub.s32 16, 16
      %15 = vsyncadd [#allocation4], %s14
      %s17 = sshll.u32 %s1, 4
      %s18 = int_to_ptr.vmem [resolvable:$true] %s17
      %20 = dma.vmem_to_smem %s18, 16, [#allocation2], [#allocation4]
    $region9: #{model_forward.1} parent=1 // pred_fallthru
      _
    // Predicated region
    $region10: #{model_forward.1} parent=1 // pred_check
      _
    $region11: #{model_forward.1} parent=1 // pred_check_branch
      %22 = sbr.rel (0) target = $region13
    $region12: #{model_forward.1} parent=1 // pred_region
      %23 = dma.done [#allocation4], 16
    $region13: #{model_forward.1} parent=1 // pred_fallthru
      _
    %24 = sfence
    %v25 = vld [vmem:[%s0] sm:$0x1f]
    %v26 = vld [vmem:[%s0 + $0x8] sm:$0x1f]
    %v27 = vld [vmem:[%s0 + $0x10] sm:$0x1f]
    %v28 = vld [vmem:[%s0 + $0x18] sm:$0x1f]
    %v29 = vld [vmem:[%s0 + $0x20] sm:$0x1f]
    %v30 = vld [vmem:[%s0 + $0x28] sm:$0x1f]
    %v31 = vld [vmem:[%s0 + $0x30] sm:$0x1f]
    %v32 = vld [vmem:[%s0 + $0x38] sm:$0x1f]
    %v33 = vld [vmem:[%s0 + $0x40] sm:$0x1f]
    %v34 = vld [vmem:[%s0 + $0x48] sm:$0x1f]
    %v35 = vld [vmem:[%s0 + $0x50] sm:$0x1f]
    %v36 = vld [vmem:[%s0 + $0x58] sm:$0x1f]
    %v37 = vld [vmem:[%s0 + $0x60] sm:$0x1f]
    %v38 = vld [vmem:[%s0 + $0x68] sm:$0x1f]
    %v39 = vld [vmem:[%s0 + $0x70] sm:$0x1f]
    %s40 = sld [smem:[#allocation2]]
    %v41 = vstv %s40
    %v42 = vmul.f32 %v25, %v41
    %v43 = vmul.f32 %v26, %v41
    %v44 = vmul.f32 %v27, %v41
    %s45 = sld [smem:[#allocation2 + $0x1b]]
    %v46 = vstv %s45
    %v47 = vmul.f32 %v25, %v46
    %v48 = vmul.f32 %v26, %v46
    %v49 = vmul.f32 %v27, %v46
    %s50 = sld [smem:[#allocation2 + $0x36]]
    %v51 = vstv %s50
    %v52 = vmul.f32 %v25, %v51
    %v53 = vmul.f32 %v26, %v51
    %v54 = vmul.f32 %v27, %v51
    %s55 = sld [smem:[#allocation2 + $0x1]]
    %v56 = vstv %s55
    %v57 = vmul.f32 %v25, %v56
    %v58 = vmul.f32 %v26, %v56
    %v59 = vmul.f32 %v27, %v56
    %v63 = vrot.slane %v57, 1
    %v64 = vrot.slane %v58, 1
    %v65 = vrot.slane %v59, 1
    %v69 = vadd.f32 %v42, %v63
    %v70 = vadd.f32 %v43, %v64
    %v71 = vadd.f32 %v44, %v65
    %s72 = sld [smem:[#allocation2 + $0x1c]]
    %v73 = vstv %s72
    %v74 = vmul.f32 %v25, %v73
    %v75 = vmul.f32 %v26, %v73
    %v76 = vmul.f32 %v27, %v73
    %v80 = vrot.slane %v74, 1
    %v81 = vrot.slane %v75, 1
    %v82 = vrot.slane %v76, 1
    %v86 = vadd.f32 %v47, %v80
    %v87 = vadd.f32 %v48, %v81
    %v88 = vadd.f32 %v49, %v82
    %s89 = sld [smem:[#allocation2 + $0x37]]
    %v90 = vstv %s89
    %v91 = vmul.f32 %v25, %v90
    %v92 = vmul.f32 %v26, %v90
    %v93 = vmul.f32 %v27, %v90
    %v97 = vrot.slane %v91, 1
    %v98 = vrot.slane %v92, 1
    %v99 = vrot.slane %v93, 1
    %v103 = vadd.f32 %v52, %v97
    %v104 = vadd.f32 %v53, %v98
    %v105 = vadd.f32 %v54, %v99
    %s106 = sld [smem:[#allocation2 + $0x2]]
    %v107 = vstv %s106
    %v108 = vmul.f32 %v25, %v107
    %v109 = vmul.f32 %v26, %v107
    %v110 = vmul.f32 %v27, %v107
    %v114 = vrot.slane %v108, 2
    %v115 = vrot.slane %v109, 2
    %v116 = vrot.slane %v110, 2
    %v120 = vadd.f32 %v69, %v114
    %v121 = vadd.f32 %v70, %v115
    %v122 = vadd.f32 %v71, %v116
    %s123 = sld [smem:[#allocation2 + $0x1d]]
    %v124 = vstv %s123
    %v125 = vmul.f32 %v25, %v124
    %v126 = vmul.f32 %v26, %v124
    %v127 = vmul.f32 %v27, %v124
    %v131 = vrot.slane %v125, 2
    %v132 = vrot.slane %v126, 2
    %v133 = vrot.slane %v127, 2
    %v137 = vadd.f32 %v86, %v131
    %v138 = vadd.f32 %v87, %v132
    %v139 = vadd.f32 %v88, %v133
    %s140 = sld [smem:[#allocation2 + $0x38]]
    %v141 = vstv %s140
    %v142 = vmul.f32 %v25, %v141
    %v143 = vmul.f32 %v26, %v141
    %v144 = vmul.f32 %v27, %v141
    %v148 = vrot.slane %v142, 2
    %v149 = vrot.slane %v143, 2
    %v150 = vrot.slane %v144, 2
    %v154 = vadd.f32 %v103, %v148
    %v155 = vadd.f32 %v104, %v149
    %v156 = vadd.f32 %v105, %v150
    %s157 = sld [smem:[#allocation2 + $0x3]]
    %v158 = vstv %s157
    %v159 = vmul.f32 %v26, %v158
    %v160 = vmul.f32 %v27, %v158
    %v161 = vmul.f32 %v28, %v158
    %v162 = vadd.f32 %v120, %v159
    %v163 = vadd.f32 %v121, %v160
    %v164 = vadd.f32 %v122, %v161
    %s165 = sld [smem:[#allocation2 + $0x1e]]
    %v166 = vstv %s165
    %v167 = vmul.f32 %v26, %v166
    %v168 = vmul.f32 %v27, %v166
    %v169 = vmul.f32 %v28, %v166
    %v170 = vadd.f32 %v137, %v167
    %v171 = vadd.f32 %v138, %v168
    %v172 = vadd.f32 %v139, %v169
    %s173 = sld [smem:[#allocation2 + $0x39]]
    %v174 = vstv %s173
    %v175 = vmul.f32 %v26, %v174
    %v176 = vmul.f32 %v27, %v174
    %v177 = vmul.f32 %v28, %v174
    %v178 = vadd.f32 %v154, %v175
    %v179 = vadd.f32 %v155, %v176
    %v180 = vadd.f32 %v156, %v177
    %s181 = sld [smem:[#allocation2 + $0x4]]
    %v182 = vstv %s181
    %v183 = vmul.f32 %v26, %v182
    %v184 = vmul.f32 %v27, %v182
    %v185 = vmul.f32 %v28, %v182
    %v189 = vrot.slane %v183, 1
    %v190 = vrot.slane %v184, 1
    %v191 = vrot.slane %v185, 1
    %v195 = vadd.f32 %v162, %v189
    %v196 = vadd.f32 %v163, %v190
    %v197 = vadd.f32 %v164, %v191
    %s198 = sld [smem:[#allocation2 + $0x1f]]
    %v199 = vstv %s198
    %v200 = vmul.f32 %v26, %v199
    %v201 = vmul.f32 %v27, %v199
    %v202 = vmul.f32 %v28, %v199
    %v206 = vrot.slane %v200, 1
    %v207 = vrot.slane %v201, 1
    %v208 = vrot.slane %v202, 1
    %v212 = vadd.f32 %v170, %v206
    %v213 = vadd.f32 %v171, %v207
    %v214 = vadd.f32 %v172, %v208
    %s215 = sld [smem:[#allocation2 + $0x3a]]
    %v216 = vstv %s215
    %v217 = vmul.f32 %v26, %v216
    %v218 = vmul.f32 %v27, %v216
    %v219 = vmul.f32 %v28, %v216
    %v223 = vrot.slane %v217, 1
    %v224 = vrot.slane %v218, 1
    %v225 = vrot.slane %v219, 1
    %v229 = vadd.f32 %v178, %v223
    %v230 = vadd.f32 %v179, %v224
    %v231 = vadd.f32 %v180, %v225
    %s232 = sld [smem:[#allocation2 + $0x5]]
    %v233 = vstv %s232
    %v234 = vmul.f32 %v26, %v233
    %v235 = vmul.f32 %v27, %v233
    %v236 = vmul.f32 %v28, %v233
    %v240 = vrot.slane %v234, 2
    %v241 = vrot.slane %v235, 2
    %v242 = vrot.slane %v236, 2
    %v246 = vadd.f32 %v195, %v240
    %v247 = vadd.f32 %v196, %v241
    %v248 = vadd.f32 %v197, %v242
    %s249 = sld [smem:[#allocation2 + $0x20]]
    %v250 = vstv %s249
    %v251 = vmul.f32 %v26, %v250
    %v252 = vmul.f32 %v27, %v250
    %v253 = vmul.f32 %v28, %v250
    %v257 = vrot.slane %v251, 2
    %v258 = vrot.slane %v252, 2
    %v259 = vrot.slane %v253, 2
    %v263 = vadd.f32 %v212, %v257
    %v264 = vadd.f32 %v213, %v258
    %v265 = vadd.f32 %v214, %v259
    %s266 = sld [smem:[#allocation2 + $0x3b]]
    %v267 = vstv %s266
    %v268 = vmul.f32 %v26, %v267
    %v269 = vmul.f32 %v27, %v267
    %v270 = vmul.f32 %v28, %v267
    %v274 = vrot.slane %v268, 2
    %v275 = vrot.slane %v269, 2
    %v276 = vrot.slane %v270, 2
    %v280 = vadd.f32 %v229, %v274
    %v281 = vadd.f32 %v230, %v275
    %v282 = vadd.f32 %v231, %v276
    %s283 = sld [smem:[#allocation2 + $0x6]]
    %v284 = vstv %s283
    %v285 = vmul.f32 %v27, %v284
    %v286 = vmul.f32 %v28, %v284
    %v287 = vmul.f32 %v29, %v284
    %v288 = vadd.f32 %v246, %v285
    %v289 = vadd.f32 %v247, %v286
    %v290 = vadd.f32 %v248, %v287
    %s291 = sld [smem:[#allocation2 + $0x21]]
    %v292 = vstv %s291
    %v293 = vmul.f32 %v27, %v292
    %v294 = vmul.f32 %v28, %v292
    %v295 = vmul.f32 %v29, %v292
    %v296 = vadd.f32 %v263, %v293
    %v297 = vadd.f32 %v264, %v294
    %v298 = vadd.f32 %v265, %v295
    %s299 = sld [smem:[#allocation2 + $0x3c]]
    %v300 = vstv %s299
    %v301 = vmul.f32 %v27, %v300
    %v302 = vmul.f32 %v28, %v300
    %v303 = vmul.f32 %v29, %v300
    %v304 = vadd.f32 %v280, %v301
    %v305 = vadd.f32 %v281, %v302
    %v306 = vadd.f32 %v282, %v303
    %s307 = sld [smem:[#allocation2 + $0x7]]
    %v308 = vstv %s307
    %v309 = vmul.f32 %v27, %v308
    %v310 = vmul.f32 %v28, %v308
    %v311 = vmul.f32 %v29, %v308
    %v315 = vrot.slane %v309, 1
    %v316 = vrot.slane %v310, 1
    %v317 = vrot.slane %v311, 1
    %v321 = vadd.f32 %v288, %v315
    %v322 = vadd.f32 %v289, %v316
    %v323 = vadd.f32 %v290, %v317
    %s324 = sld [smem:[#allocation2 + $0x22]]
    %v325 = vstv %s324
    %v326 = vmul.f32 %v27, %v325
    %v327 = vmul.f32 %v28, %v325
    %v328 = vmul.f32 %v29, %v325
    %v332 = vrot.slane %v326, 1
    %v333 = vrot.slane %v327, 1
    %v334 = vrot.slane %v328, 1
    %v338 = vadd.f32 %v296, %v332
    %v339 = vadd.f32 %v297, %v333
    %v340 = vadd.f32 %v298, %v334
    %s341 = sld [smem:[#allocation2 + $0x3d]]
    %v342 = vstv %s341
    %v343 = vmul.f32 %v27, %v342
    %v344 = vmul.f32 %v28, %v342
    %v345 = vmul.f32 %v29, %v342
    %v349 = vrot.slane %v343, 1
    %v350 = vrot.slane %v344, 1
    %v351 = vrot.slane %v345, 1
    %v355 = vadd.f32 %v304, %v349
    %v356 = vadd.f32 %v305, %v350
    %v357 = vadd.f32 %v306, %v351
    %s358 = sld [smem:[#allocation2 + $0x8]]
    %v359 = vstv %s358
    %v360 = vmul.f32 %v27, %v359
    %v361 = vmul.f32 %v28, %v359
    %v362 = vmul.f32 %v29, %v359
    %v366 = vrot.slane %v360, 2
    %v367 = vrot.slane %v361, 2
    %v368 = vrot.slane %v362, 2
    %v372 = vadd.f32 %v321, %v366
    %v373 = vadd.f32 %v322, %v367
    %v374 = vadd.f32 %v323, %v368
    %s375 = sld [smem:[#allocation2 + $0x23]]
    %v376 = vstv %s375
    %v377 = vmul.f32 %v27, %v376
    %v378 = vmul.f32 %v28, %v376
    %v379 = vmul.f32 %v29, %v376
    %v383 = vrot.slane %v377, 2
    %v384 = vrot.slane %v378, 2
    %v385 = vrot.slane %v379, 2
    %v389 = vadd.f32 %v338, %v383
    %v390 = vadd.f32 %v339, %v384
    %v391 = vadd.f32 %v340, %v385
    %s392 = sld [smem:[#allocation2 + $0x3e]]
    %v393 = vstv %s392
    %v394 = vmul.f32 %v27, %v393
    %v395 = vmul.f32 %v28, %v393
    %v396 = vmul.f32 %v29, %v393
    %v400 = vrot.slane %v394, 2
    %v401 = vrot.slane %v395, 2
    %v402 = vrot.slane %v396, 2
    %v406 = vadd.f32 %v355, %v400
    %v407 = vadd.f32 %v356, %v401
    %v408 = vadd.f32 %v357, %v402
    %s409 = sld [smem:[#allocation2 + $0x9]]
    %v410 = vstv %s409
    %v411 = vmul.f32 %v30, %v410
    %v412 = vmul.f32 %v31, %v410
    %v413 = vmul.f32 %v32, %v410
    %v414 = vadd.f32 %v372, %v411
    %v415 = vadd.f32 %v373, %v412
    %v416 = vadd.f32 %v374, %v413
    %s417 = sld [smem:[#allocation2 + $0x24]]
    %v418 = vstv %s417
    %v419 = vmul.f32 %v30, %v418
    %v420 = vmul.f32 %v31, %v418
    %v421 = vmul.f32 %v32, %v418
    %v422 = vadd.f32 %v389, %v419
    %v423 = vadd.f32 %v390, %v420
    %v424 = vadd.f32 %v391, %v421
    %s425 = sld [smem:[#allocation2 + $0x3f]]
    %v426 = vstv %s425
    %v427 = vmul.f32 %v30, %v426
    %v428 = vmul.f32 %v31, %v426
    %v429 = vmul.f32 %v32, %v426
    %v430 = vadd.f32 %v406, %v427
    %v431 = vadd.f32 %v407, %v428
    %v432 = vadd.f32 %v408, %v429
    %s433 = sld [smem:[#allocation2 + $0xa]]
    %v434 = vstv %s433
    %v435 = vmul.f32 %v30, %v434
    %v436 = vmul.f32 %v31, %v434
    %v437 = vmul.f32 %v32, %v434
    %v441 = vrot.slane %v435, 1
    %v442 = vrot.slane %v436, 1
    %v443 = vrot.slane %v437, 1
    %v447 = vadd.f32 %v414, %v441
    %v448 = vadd.f32 %v415, %v442
    %v449 = vadd.f32 %v416, %v443
    %s450 = sld [smem:[#allocation2 + $0x25]]
    %v451 = vstv %s450
    %v452 = vmul.f32 %v30, %v451
    %v453 = vmul.f32 %v31, %v451
    %v454 = vmul.f32 %v32, %v451
    %v458 = vrot.slane %v452, 1
    %v459 = vrot.slane %v453, 1
    %v460 = vrot.slane %v454, 1
    %v464 = vadd.f32 %v422, %v458
    %v465 = vadd.f32 %v423, %v459
    %v466 = vadd.f32 %v424, %v460
    %s467 = sld [smem:[#allocation2 + $0x40]]
    %v468 = vstv %s467
    %v469 = vmul.f32 %v30, %v468
    %v470 = vmul.f32 %v31, %v468
    %v471 = vmul.f32 %v32, %v468
    %v475 = vrot.slane %v469, 1
    %v476 = vrot.slane %v470, 1
    %v477 = vrot.slane %v471, 1
    %v481 = vadd.f32 %v430, %v475
    %v482 = vadd.f32 %v431, %v476
    %v483 = vadd.f32 %v432, %v477
    %s484 = sld [smem:[#allocation2 + $0xb]]
    %v485 = vstv %s484
    %v486 = vmul.f32 %v30, %v485
    %v487 = vmul.f32 %v31, %v485
    %v488 = vmul.f32 %v32, %v485
    %v492 = vrot.slane %v486, 2
    %v493 = vrot.slane %v487, 2
    %v494 = vrot.slane %v488, 2
    %v498 = vadd.f32 %v447, %v492
    %v499 = vadd.f32 %v448, %v493
    %v500 = vadd.f32 %v449, %v494
    %s501 = sld [smem:[#allocation2 + $0x26]]
    %v502 = vstv %s501
    %v503 = vmul.f32 %v30, %v502
    %v504 = vmul.f32 %v31, %v502
    %v505 = vmul.f32 %v32, %v502
    %v509 = vrot.slane %v503, 2
    %v510 = vrot.slane %v504, 2
    %v511 = vrot.slane %v505, 2
    %v515 = vadd.f32 %v464, %v509
    %v516 = vadd.f32 %v465, %v510
    %v517 = vadd.f32 %v466, %v511
    %s518 = sld [smem:[#allocation2 + $0x41]]
    %v519 = vstv %s518
    %v520 = vmul.f32 %v30, %v519
    %v521 = vmul.f32 %v31, %v519
    %v522 = vmul.f32 %v32, %v519
    %v526 = vrot.slane %v520, 2
    %v527 = vrot.slane %v521, 2
    %v528 = vrot.slane %v522, 2
    %v532 = vadd.f32 %v481, %v526
    %v533 = vadd.f32 %v482, %v527
    %v534 = vadd.f32 %v483, %v528
    %s535 = sld [smem:[#allocation2 + $0xc]]
    %v536 = vstv %s535
    %v537 = vmul.f32 %v31, %v536
    %v538 = vmul.f32 %v32, %v536
    %v539 = vmul.f32 %v33, %v536
    %v540 = vadd.f32 %v498, %v537
    %v541 = vadd.f32 %v499, %v538
    %v542 = vadd.f32 %v500, %v539
    %s543 = sld [smem:[#allocation2 + $0x27]]
    %v544 = vstv %s543
    %v545 = vmul.f32 %v31, %v544
    %v546 = vmul.f32 %v32, %v544
    %v547 = vmul.f32 %v33, %v544
    %v548 = vadd.f32 %v515, %v545
    %v549 = vadd.f32 %v516, %v546
    %v550 = vadd.f32 %v517, %v547
    %s551 = sld [smem:[#allocation2 + $0x42]]
    %v552 = vstv %s551
    %v553 = vmul.f32 %v31, %v552
    %v554 = vmul.f32 %v32, %v552
    %v555 = vmul.f32 %v33, %v552
    %v556 = vadd.f32 %v532, %v553
    %v557 = vadd.f32 %v533, %v554
    %v558 = vadd.f32 %v534, %v555
    %s559 = sld [smem:[#allocation2 + $0xd]]
    %v560 = vstv %s559
    %v561 = vmul.f32 %v31, %v560
    %v562 = vmul.f32 %v32, %v560
    %v563 = vmul.f32 %v33, %v560
    %v567 = vrot.slane %v561, 1
    %v568 = vrot.slane %v562, 1
    %v569 = vrot.slane %v563, 1
    %v573 = vadd.f32 %v540, %v567
    %v574 = vadd.f32 %v541, %v568
    %v575 = vadd.f32 %v542, %v569
    %s576 = sld [smem:[#allocation2 + $0x28]]
    %v577 = vstv %s576
    %v578 = vmul.f32 %v31, %v577
    %v579 = vmul.f32 %v32, %v577
    %v580 = vmul.f32 %v33, %v577
    %v584 = vrot.slane %v578, 1
    %v585 = vrot.slane %v579, 1
    %v586 = vrot.slane %v580, 1
    %v590 = vadd.f32 %v548, %v584
    %v591 = vadd.f32 %v549, %v585
    %v592 = vadd.f32 %v550, %v586
    %s593 = sld [smem:[#allocation2 + $0x43]]
    %v594 = vstv %s593
    %v595 = vmul.f32 %v31, %v594
    %v596 = vmul.f32 %v32, %v594
    %v597 = vmul.f32 %v33, %v594
    %v601 = vrot.slane %v595, 1
    %v602 = vrot.slane %v596, 1
    %v603 = vrot.slane %v597, 1
    %v607 = vadd.f32 %v556, %v601
    %v608 = vadd.f32 %v557, %v602
    %v609 = vadd.f32 %v558, %v603
    %s610 = sld [smem:[#allocation2 + $0xe]]
    %v611 = vstv %s610
    %v612 = vmul.f32 %v31, %v611
    %v613 = vmul.f32 %v32, %v611
    %v614 = vmul.f32 %v33, %v611
    %v618 = vrot.slane %v612, 2
    %v619 = vrot.slane %v613, 2
    %v620 = vrot.slane %v614, 2
    %v624 = vadd.f32 %v573, %v618
    %v625 = vadd.f32 %v574, %v619
    %v626 = vadd.f32 %v575, %v620
    %s627 = sld [smem:[#allocation2 + $0x29]]
    %v628 = vstv %s627
    %v629 = vmul.f32 %v31, %v628
    %v630 = vmul.f32 %v32, %v628
    %v631 = vmul.f32 %v33, %v628
    %v635 = vrot.slane %v629, 2
    %v636 = vrot.slane %v630, 2
    %v637 = vrot.slane %v631, 2
    %v641 = vadd.f32 %v590, %v635
    %v642 = vadd.f32 %v591, %v636
    %v643 = vadd.f32 %v592, %v637
    %s644 = sld [smem:[#allocation2 + $0x44]]
    %v645 = vstv %s644
    %v646 = vmul.f32 %v31, %v645
    %v647 = vmul.f32 %v32, %v645
    %v648 = vmul.f32 %v33, %v645
    %v652 = vrot.slane %v646, 2
    %v653 = vrot.slane %v647, 2
    %v654 = vrot.slane %v648, 2
    %v658 = vadd.f32 %v607, %v652
    %v659 = vadd.f32 %v608, %v653
    %v660 = vadd.f32 %v609, %v654
    %s661 = sld [smem:[#allocation2 + $0xf]]
    %v662 = vstv %s661
    %v663 = vmul.f32 %v32, %v662
    %v664 = vmul.f32 %v33, %v662
    %v665 = vmul.f32 %v34, %v662
    %v666 = vadd.f32 %v624, %v663
    %v667 = vadd.f32 %v625, %v664
    %v668 = vadd.f32 %v626, %v665
    %s669 = sld [smem:[#allocation2 + $0x2a]]
    %v670 = vstv %s669
    %v671 = vmul.f32 %v32, %v670
    %v672 = vmul.f32 %v33, %v670
    %v673 = vmul.f32 %v34, %v670
    %v674 = vadd.f32 %v641, %v671
    %v675 = vadd.f32 %v642, %v672
    %v676 = vadd.f32 %v643, %v673
    %s677 = sld [smem:[#allocation2 + $0x45]]
    %v678 = vstv %s677
    %v679 = vmul.f32 %v32, %v678
    %v680 = vmul.f32 %v33, %v678
    %v681 = vmul.f32 %v34, %v678
    %v682 = vadd.f32 %v658, %v679
    %v683 = vadd.f32 %v659, %v680
    %v684 = vadd.f32 %v660, %v681
    %s685 = sld [smem:[#allocation2 + $0x10]]
    %v686 = vstv %s685
    %v687 = vmul.f32 %v32, %v686
    %v688 = vmul.f32 %v33, %v686
    %v689 = vmul.f32 %v34, %v686
    %v693 = vrot.slane %v687, 1
    %v694 = vrot.slane %v688, 1
    %v695 = vrot.slane %v689, 1
    %v699 = vadd.f32 %v666, %v693
    %v700 = vadd.f32 %v667, %v694
    %v701 = vadd.f32 %v668, %v695
    %s702 = sld [smem:[#allocation2 + $0x2b]]
    %v703 = vstv %s702
    %v704 = vmul.f32 %v32, %v703
    %v705 = vmul.f32 %v33, %v703
    %v706 = vmul.f32 %v34, %v703
    %v710 = vrot.slane %v704, 1
    %v711 = vrot.slane %v705, 1
    %v712 = vrot.slane %v706, 1
    %v716 = vadd.f32 %v674, %v710
    %v717 = vadd.f32 %v675, %v711
    %v718 = vadd.f32 %v676, %v712
    %s719 = sld [smem:[#allocation2 + $0x46]]
    %v720 = vstv %s719
    %v721 = vmul.f32 %v32, %v720
    %v722 = vmul.f32 %v33, %v720
    %v723 = vmul.f32 %v34, %v720
    %v727 = vrot.slane %v721, 1
    %v728 = vrot.slane %v722, 1
    %v729 = vrot.slane %v723, 1
    %v733 = vadd.f32 %v682, %v727
    %v734 = vadd.f32 %v683, %v728
    %v735 = vadd.f32 %v684, %v729
    %s736 = sld [smem:[#allocation2 + $0x11]]
    %v737 = vstv %s736
    %v738 = vmul.f32 %v32, %v737
    %v739 = vmul.f32 %v33, %v737
    %v740 = vmul.f32 %v34, %v737
    %v744 = vrot.slane %v738, 2
    %v745 = vrot.slane %v739, 2
    %v746 = vrot.slane %v740, 2
    %v750 = vadd.f32 %v699, %v744
    %v751 = vadd.f32 %v700, %v745
    %v752 = vadd.f32 %v701, %v746
    %s753 = sld [smem:[#allocation2 + $0x2c]]
    %v754 = vstv %s753
    %v755 = vmul.f32 %v32, %v754
    %v756 = vmul.f32 %v33, %v754
    %v757 = vmul.f32 %v34, %v754
    %v761 = vrot.slane %v755, 2
    %v762 = vrot.slane %v756, 2
    %v763 = vrot.slane %v757, 2
    %v767 = vadd.f32 %v716, %v761
    %v768 = vadd.f32 %v717, %v762
    %v769 = vadd.f32 %v718, %v763
    %s770 = sld [smem:[#allocation2 + $0x47]]
    %v771 = vstv %s770
    %v772 = vmul.f32 %v32, %v771
    %v773 = vmul.f32 %v33, %v771
    %v774 = vmul.f32 %v34, %v771
    %v778 = vrot.slane %v772, 2
    %v779 = vrot.slane %v773, 2
    %v780 = vrot.slane %v774, 2
    %v784 = vadd.f32 %v733, %v778
    %v785 = vadd.f32 %v734, %v779
    %v786 = vadd.f32 %v735, %v780
    %s787 = sld [smem:[#allocation2 + $0x12]]
    %v788 = vstv %s787
    %v789 = vmul.f32 %v35, %v788
    %v790 = vmul.f32 %v36, %v788
    %v791 = vmul.f32 %v37, %v788
    %v792 = vadd.f32 %v750, %v789
    %v793 = vadd.f32 %v751, %v790
    %v794 = vadd.f32 %v752, %v791
    %s795 = sld [smem:[#allocation2 + $0x2d]]
    %v796 = vstv %s795
    %v797 = vmul.f32 %v35, %v796
    %v798 = vmul.f32 %v36, %v796
    %v799 = vmul.f32 %v37, %v796
    %v800 = vadd.f32 %v767, %v797
    %v801 = vadd.f32 %v768, %v798
    %v802 = vadd.f32 %v769, %v799
    %s803 = sld [smem:[#allocation2 + $0x48]]
    %v804 = vstv %s803
    %v805 = vmul.f32 %v35, %v804
    %v806 = vmul.f32 %v36, %v804
    %v807 = vmul.f32 %v37, %v804
    %v808 = vadd.f32 %v784, %v805
    %v809 = vadd.f32 %v785, %v806
    %v810 = vadd.f32 %v786, %v807
    %s811 = sld [smem:[#allocation2 + $0x13]]
    %v812 = vstv %s811
    %v813 = vmul.f32 %v35, %v812
    %v814 = vmul.f32 %v36, %v812
    %v815 = vmul.f32 %v37, %v812
    %v819 = vrot.slane %v813, 1
    %v820 = vrot.slane %v814, 1
    %v821 = vrot.slane %v815, 1
    %v825 = vadd.f32 %v792, %v819
    %v826 = vadd.f32 %v793, %v820
    %v827 = vadd.f32 %v794, %v821
    %s828 = sld [smem:[#allocation2 + $0x2e]]
    %v829 = vstv %s828
    %v830 = vmul.f32 %v35, %v829
    %v831 = vmul.f32 %v36, %v829
    %v832 = vmul.f32 %v37, %v829
    %v836 = vrot.slane %v830, 1
    %v837 = vrot.slane %v831, 1
    %v838 = vrot.slane %v832, 1
    %v842 = vadd.f32 %v800, %v836
    %v843 = vadd.f32 %v801, %v837
    %v844 = vadd.f32 %v802, %v838
    %s845 = sld [smem:[#allocation2 + $0x49]]
    %v846 = vstv %s845
    %v847 = vmul.f32 %v35, %v846
    %v848 = vmul.f32 %v36, %v846
    %v849 = vmul.f32 %v37, %v846
    %v853 = vrot.slane %v847, 1
    %v854 = vrot.slane %v848, 1
    %v855 = vrot.slane %v849, 1
    %v859 = vadd.f32 %v808, %v853
    %v860 = vadd.f32 %v809, %v854
    %v861 = vadd.f32 %v810, %v855
    %s862 = sld [smem:[#allocation2 + $0x14]]
    %v863 = vstv %s862
    %v864 = vmul.f32 %v35, %v863
    %v865 = vmul.f32 %v36, %v863
    %v866 = vmul.f32 %v37, %v863
    %v870 = vrot.slane %v864, 2
    %v871 = vrot.slane %v865, 2
    %v872 = vrot.slane %v866, 2
    %v876 = vadd.f32 %v825, %v870
    %v877 = vadd.f32 %v826, %v871
    %v878 = vadd.f32 %v827, %v872
    %s879 = sld [smem:[#allocation2 + $0x2f]]
    %v880 = vstv %s879
    %v881 = vmul.f32 %v35, %v880
    %v882 = vmul.f32 %v36, %v880
    %v883 = vmul.f32 %v37, %v880
    %v887 = vrot.slane %v881, 2
    %v888 = vrot.slane %v882, 2
    %v889 = vrot.slane %v883, 2
    %v893 = vadd.f32 %v842, %v887
    %v894 = vadd.f32 %v843, %v888
    %v895 = vadd.f32 %v844, %v889
    %s896 = sld [smem:[#allocation2 + $0x4a]]
    %v897 = vstv %s896
    %v898 = vmul.f32 %v35, %v897
    %v899 = vmul.f32 %v36, %v897
    %v900 = vmul.f32 %v37, %v897
    %v904 = vrot.slane %v898, 2
    %v905 = vrot.slane %v899, 2
    %v906 = vrot.slane %v900, 2
    %v910 = vadd.f32 %v859, %v904
    %v911 = vadd.f32 %v860, %v905
    %v912 = vadd.f32 %v861, %v906
    %s913 = sld [smem:[#allocation2 + $0x15]]
    %v914 = vstv %s913
    %v915 = vmul.f32 %v36, %v914
    %v916 = vmul.f32 %v37, %v914
    %v917 = vmul.f32 %v38, %v914
    %v918 = vadd.f32 %v876, %v915
    %v919 = vadd.f32 %v877, %v916
    %v920 = vadd.f32 %v878, %v917
    %s921 = sld [smem:[#allocation2 + $0x30]]
    %v922 = vstv %s921
    %v923 = vmul.f32 %v36, %v922
    %v924 = vmul.f32 %v37, %v922
    %v925 = vmul.f32 %v38, %v922
    %v926 = vadd.f32 %v893, %v923
    %v927 = vadd.f32 %v894, %v924
    %v928 = vadd.f32 %v895, %v925
    %s929 = sld [smem:[#allocation2 + $0x4b]]
    %v930 = vstv %s929
    %v931 = vmul.f32 %v36, %v930
    %v932 = vmul.f32 %v37, %v930
    %v933 = vmul.f32 %v38, %v930
    %v934 = vadd.f32 %v910, %v931
    %v935 = vadd.f32 %v911, %v932
    %v936 = vadd.f32 %v912, %v933
    %s937 = sld [smem:[#allocation2 + $0x16]]
    %v938 = vstv %s937
    %v939 = vmul.f32 %v36, %v938
    %v940 = vmul.f32 %v37, %v938
    %v941 = vmul.f32 %v38, %v938
    %v945 = vrot.slane %v939, 1
    %v946 = vrot.slane %v940, 1
    %v947 = vrot.slane %v941, 1
    %v951 = vadd.f32 %v918, %v945
    %v952 = vadd.f32 %v919, %v946
    %v953 = vadd.f32 %v920, %v947
    %s954 = sld [smem:[#allocation2 + $0x31]]
    %v955 = vstv %s954
    %v956 = vmul.f32 %v36, %v955
    %v957 = vmul.f32 %v37, %v955
    %v958 = vmul.f32 %v38, %v955
    %v962 = vrot.slane %v956, 1
    %v963 = vrot.slane %v957, 1
    %v964 = vrot.slane %v958, 1
    %v968 = vadd.f32 %v926, %v962
    %v969 = vadd.f32 %v927, %v963
    %v970 = vadd.f32 %v928, %v964
    %s971 = sld [smem:[#allocation2 + $0x4c]]
    %v972 = vstv %s971
    %v973 = vmul.f32 %v36, %v972
    %v974 = vmul.f32 %v37, %v972
    %v975 = vmul.f32 %v38, %v972
    %v979 = vrot.slane %v973, 1
    %v980 = vrot.slane %v974, 1
    %v981 = vrot.slane %v975, 1
    %v985 = vadd.f32 %v934, %v979
    %v986 = vadd.f32 %v935, %v980
    %v987 = vadd.f32 %v936, %v981
    %s988 = sld [smem:[#allocation2 + $0x17]]
    %v989 = vstv %s988
    %v990 = vmul.f32 %v36, %v989
    %v991 = vmul.f32 %v37, %v989
    %v992 = vmul.f32 %v38, %v989
    %v996 = vrot.slane %v990, 2
    %v997 = vrot.slane %v991, 2
    %v998 = vrot.slane %v992, 2
    %v1002 = vadd.f32 %v951, %v996
    %v1003 = vadd.f32 %v952, %v997
    %v1004 = vadd.f32 %v953, %v998
    %s1005 = sld [smem:[#allocation2 + $0x32]]
    %v1006 = vstv %s1005
    %v1007 = vmul.f32 %v36, %v1006
    %v1008 = vmul.f32 %v37, %v1006
    %v1009 = vmul.f32 %v38, %v1006
    %v1013 = vrot.slane %v1007, 2
    %v1014 = vrot.slane %v1008, 2
    %v1015 = vrot.slane %v1009, 2
    %v1019 = vadd.f32 %v968, %v1013
    %v1020 = vadd.f32 %v969, %v1014
    %v1021 = vadd.f32 %v970, %v1015
    %s1022 = sld [smem:[#allocation2 + $0x4d]]
    %v1023 = vstv %s1022
    %v1024 = vmul.f32 %v36, %v1023
    %v1025 = vmul.f32 %v37, %v1023
    %v1026 = vmul.f32 %v38, %v1023
    %v1030 = vrot.slane %v1024, 2
    %v1031 = vrot.slane %v1025, 2
    %v1032 = vrot.slane %v1026, 2
    %v1036 = vadd.f32 %v985, %v1030
    %v1037 = vadd.f32 %v986, %v1031
    %v1038 = vadd.f32 %v987, %v1032
    %s1039 = sld [smem:[#allocation2 + $0x18]]
    %v1040 = vstv %s1039
    %v1041 = vmul.f32 %v37, %v1040
    %v1042 = vmul.f32 %v38, %v1040
    %v1043 = vmul.f32 %v39, %v1040
    %v1044 = vadd.f32 %v1002, %v1041
    %v1045 = vadd.f32 %v1003, %v1042
    %v1046 = vadd.f32 %v1004, %v1043
    %s1047 = sld [smem:[#allocation2 + $0x33]]
    %v1048 = vstv %s1047
    %v1049 = vmul.f32 %v37, %v1048
    %v1050 = vmul.f32 %v38, %v1048
    %v1051 = vmul.f32 %v39, %v1048
    %v1052 = vadd.f32 %v1019, %v1049
    %v1053 = vadd.f32 %v1020, %v1050
    %v1054 = vadd.f32 %v1021, %v1051
    %s1055 = sld [smem:[#allocation2 + $0x4e]]
    %v1056 = vstv %s1055
    %v1057 = vmul.f32 %v37, %v1056
    %v1058 = vmul.f32 %v38, %v1056
    %v1059 = vmul.f32 %v39, %v1056
    %v1060 = vadd.f32 %v1036, %v1057
    %v1061 = vadd.f32 %v1037, %v1058
    %v1062 = vadd.f32 %v1038, %v1059
    %s1063 = sld [smem:[#allocation2 + $0x19]]
    %v1064 = vstv %s1063
    %v1065 = vmul.f32 %v37, %v1064
    %v1066 = vmul.f32 %v38, %v1064
    %v1067 = vmul.f32 %v39, %v1064
    %v1071 = vrot.slane %v1065, 1
    %v1072 = vrot.slane %v1066, 1
    %v1073 = vrot.slane %v1067, 1
    %v1077 = vadd.f32 %v1044, %v1071
    %v1078 = vadd.f32 %v1045, %v1072
    %v1079 = vadd.f32 %v1046, %v1073
    %s1080 = sld [smem:[#allocation2 + $0x34]]
    %v1081 = vstv %s1080
    %v1082 = vmul.f32 %v37, %v1081
    %v1083 = vmul.f32 %v38, %v1081
    %v1084 = vmul.f32 %v39, %v1081
    %v1088 = vrot.slane %v1082, 1
    %v1089 = vrot.slane %v1083, 1
    %v1090 = vrot.slane %v1084, 1
    %v1094 = vadd.f32 %v1052, %v1088
    %v1095 = vadd.f32 %v1053, %v1089
    %v1096 = vadd.f32 %v1054, %v1090
    %s1097 = sld [smem:[#allocation2 + $0x4f]]
    %v1098 = vstv %s1097
    %v1099 = vmul.f32 %v37, %v1098
    %v1100 = vmul.f32 %v38, %v1098
    %v1101 = vmul.f32 %v39, %v1098
    %v1105 = vrot.slane %v1099, 1
    %v1106 = vrot.slane %v1100, 1
    %v1107 = vrot.slane %v1101, 1
    %v1111 = vadd.f32 %v1060, %v1105
    %v1112 = vadd.f32 %v1061, %v1106
    %v1113 = vadd.f32 %v1062, %v1107
    %s1114 = sld [smem:[#allocation2 + $0x1a]]
    %v1115 = vstv %s1114
    %v1116 = vmul.f32 %v37, %v1115
    %v1117 = vmul.f32 %v38, %v1115
    %v1118 = vmul.f32 %v39, %v1115
    %v1122 = vrot.slane %v1116, 2
    %v1123 = vrot.slane %v1117, 2
    %v1124 = vrot.slane %v1118, 2
    %v1128 = vadd.f32 %v1077, %v1122
    %v1129 = vadd.f32 %v1078, %v1123
    %v1130 = vadd.f32 %v1079, %v1124
    %s1131 = sld [smem:[#allocation2 + $0x35]]
    %v1132 = vstv %s1131
    %v1133 = vmul.f32 %v37, %v1132
    %v1134 = vmul.f32 %v38, %v1132
    %v1135 = vmul.f32 %v39, %v1132
    %v1139 = vrot.slane %v1133, 2
    %v1140 = vrot.slane %v1134, 2
    %v1141 = vrot.slane %v1135, 2
    %v1145 = vadd.f32 %v1094, %v1139
    %v1146 = vadd.f32 %v1095, %v1140
    %v1147 = vadd.f32 %v1096, %v1141
    %s1148 = sld [smem:[#allocation2 + $0x50]]
    %v1149 = vstv %s1148
    %v1150 = vmul.f32 %v37, %v1149
    %v1151 = vmul.f32 %v38, %v1149
    %v1152 = vmul.f32 %v39, %v1149
    %v1156 = vrot.slane %v1150, 2
    %v1157 = vrot.slane %v1151, 2
    %v1158 = vrot.slane %v1152, 2
    %v1162 = vadd.f32 %v1111, %v1156
    %v1163 = vadd.f32 %v1112, %v1157
    %v1164 = vadd.f32 %v1113, %v1158
    %s1165 = sld [smem:[#allocation2 + $0x51]]
    %v1166 = vstv %s1165
    %v1167 = vadd.f32 %v1128, %v1166
    %v1168 = vadd.f32 %v1129, %v1166
    %v1169 = vadd.f32 %v1130, %v1166
    %vm1170 = vcmask 59392
    %v1171 = vsel %vm1170, %v1167, 0.0
    %v1172 = vsel %vm1170, %v1168, 0.0
    %v1173 = vadd.f32 %v1171, %v1172
    %v1174 = vsel %vm1170, %v1169, 0.0
    %v1175 = vadd.f32 %v1173, %v1174
    %1176 = vadd.xlane.f32.xlu0 %v1175
    %v1177 = vpop.xlane.xlu0 %1176
    %v1178 = vrot.slane %v1177, 4
    %v1179 = vadd.f32 %v1177, %v1178
    %v1180 = vrot.slane %v1179, 2
    %v1181 = vadd.f32 %v1179, %v1180
    %v1182 = vrot.slane %v1181, 1
    %v1183 = vadd.f32 %v1181, %v1182
    %s1184 = vtos %v1183
    %s1185 = smul.f32 %s1184, 0.013888889
    %v1186 = vstv %s1185
    %v1187 = vsub.f32 %v1167, %v1186
    %v1188 = vsub.f32 %v1168, %v1186
    %v1189 = vsub.f32 %v1169, %v1186
    %v1190 = vmul.f32 %v1187, %v1187
    %v1191 = vmul.f32 %v1188, %v1188
    %v1192 = vmul.f32 %v1189, %v1189
    %v1193 = vsel %vm1170, %v1190, 0.0
    %v1194 = vsel %vm1170, %v1191, 0.0
    %v1195 = vadd.f32 %v1193, %v1194
    %v1196 = vsel %vm1170, %v1192, 0.0
    %v1197 = vadd.f32 %v1195, %v1196
    %1198 = vadd.xlane.f32.xlu0 %v1197
    %v1199 = vpop.xlane.xlu0 %1198
    %v1200 = vrot.slane %v1199, 4
    %v1201 = vadd.f32 %v1199, %v1200
    %v1202 = vrot.slane %v1201, 2
    %v1203 = vadd.f32 %v1201, %v1202
    %v1204 = vrot.slane %v1203, 1
    %v1205 = vadd.f32 %v1203, %v1204
    %s1206 = vtos %v1205
    %s1207 = smul.f32 %s1206, 0.013888889
    %s1208 = sadd.f32 %s1207, 1e-05
    %v1209 = vstv %s1208
    %v1210 = vrsqrt.pop %v1209
    %s1211 = vtos %v1210
    %s1212 = sld [smem:[#allocation2 + $0x54]]
    %v1213 = vstv %s1211
    %v1214 = vmul.f32 %v1187, %v1213
    %v1215 = vmul.f32 %v1188, %v1213
    %v1216 = vmul.f32 %v1189, %v1213
    %v1217 = vstv %s1212
    %v1218 = vmul.f32 %v1217, %v1214
    %v1219 = vmul.f32 %v1217, %v1215
    %v1220 = vmul.f32 %v1217, %v1216
    %s1221 = sld [smem:[#allocation2 + $0x57]]
    %v1222 = vstv %s1221
    %v1223 = vadd.f32 %v1218, %v1222
    %v1224 = vadd.f32 %v1219, %v1222
    %v1225 = vadd.f32 %v1220, %v1222
    %s1226 = sld [smem:[#allocation2 + $0x52]]
    %v1227 = vstv %s1226
    %v1228 = vadd.f32 %v1145, %v1227
    %v1229 = vadd.f32 %v1146, %v1227
    %v1230 = vadd.f32 %v1147, %v1227
    %v1231 = vsel %vm1170, %v1228, 0.0
    %v1232 = vsel %vm1170, %v1229, 0.0
    %v1233 = vadd.f32 %v1231, %v1232
    %v1234 = vsel %vm1170, %v1230, 0.0
    %v1235 = vadd.f32 %v1233, %v1234
    %1236 = vadd.xlane.f32.xlu0 %v1235
    %v1237 = vpop.xlane.xlu0 %1236
    %v1238 = vrot.slane %v1237, 4
    %v1239 = vadd.f32 %v1237, %v1238
    %v1240 = vrot.slane %v1239, 2
    %v1241 = vadd.f32 %v1239, %v1240
    %v1242 = vrot.slane %v1241, 1
    %v1243 = vadd.f32 %v1241, %v1242
    %s1244 = vtos %v1243
    %s1245 = smul.f32 %s1244, 0.013888889
    %v1246 = vstv %s1245
    %v1247 = vsub.f32 %v1228, %v1246
    %v1248 = vsub.f32 %v1229, %v1246
    %v1249 = vsub.f32 %v1230, %v1246
    %v1250 = vmul.f32 %v1247, %v1247
    %v1251 = vmul.f32 %v1248, %v1248
    %v1252 = vmul.f32 %v1249, %v1249
    %v1253 = vsel %vm1170, %v1250, 0.0
    %v1254 = vsel %vm1170, %v1251, 0.0
    %v1255 = vadd.f32 %v1253, %v1254
    %v1256 = vsel %vm1170, %v1252, 0.0
    %v1257 = vadd.f32 %v1255, %v1256
    %1258 = vadd.xlane.f32.xlu0 %v1257
    %v1259 = vpop.xlane.xlu0 %1258
    %v1260 = vrot.slane %v1259, 4
    %v1261 = vadd.f32 %v1259, %v1260
    %v1262 = vrot.slane %v1261, 2
    %v1263 = vadd.f32 %v1261, %v1262
    %v1264 = vrot.slane %v1263, 1
    %v1265 = vadd.f32 %v1263, %v1264
    %s1266 = vtos %v1265
    %s1267 = smul.f32 %s1266, 0.013888889
    %s1268 = sadd.f32 %s1267, 1e-05
    %v1269 = vstv %s1268
    %v1270 = vrsqrt.pop %v1269
    %s1271 = vtos %v1270
    %s1272 = sld [smem:[#allocation2 + $0x55]]
    %v1273 = vstv %s1271
    %v1274 = vmul.f32 %v1247, %v1273
    %v1275 = vmul.f32 %v1248, %v1273
    %v1276 = vmul.f32 %v1249, %v1273
    %v1277 = vstv %s1272
    %v1278 = vmul.f32 %v1277, %v1274
    %v1279 = vmul.f32 %v1277, %v1275
    %v1280 = vmul.f32 %v1277, %v1276
    %s1281 = sld [smem:[#allocation2 + $0x58]]
    %v1282 = vstv %s1281
    %v1283 = vadd.f32 %v1278, %v1282
    %v1284 = vadd.f32 %v1279, %v1282
    %v1285 = vadd.f32 %v1280, %v1282
    %s1286 = sld [smem:[#allocation2 + $0x53]]
    %v1287 = vstv %s1286
    %v1288 = vadd.f32 %v1162, %v1287
    %v1289 = vadd.f32 %v1163, %v1287
    %v1290 = vadd.f32 %v1164, %v1287
    %v1291 = vsel %vm1170, %v1288, 0.0
    %v1292 = vsel %vm1170, %v1289, 0.0
    %v1293 = vadd.f32 %v1291, %v1292
    %v1294 = vsel %vm1170, %v1290, 0.0
    %v1295 = vadd.f32 %v1293, %v1294
    %1296 = vadd.xlane.f32.xlu0 %v1295
    %v1297 = vpop.xlane.xlu0 %1296
    %v1298 = vrot.slane %v1297, 4
    %v1299 = vadd.f32 %v1297, %v1298
    %v1300 = vrot.slane %v1299, 2
    %v1301 = vadd.f32 %v1299, %v1300
    %v1302 = vrot.slane %v1301, 1
    %v1303 = vadd.f32 %v1301, %v1302
    %s1304 = vtos %v1303
    %s1305 = smul.f32 %s1304, 0.013888889
    %v1306 = vstv %s1305
    %v1307 = vsub.f32 %v1288, %v1306
    %v1308 = vsub.f32 %v1289, %v1306
    %v1309 = vsub.f32 %v1290, %v1306
    %v1310 = vmul.f32 %v1307, %v1307
    %v1311 = vmul.f32 %v1308, %v1308
    %v1312 = vmul.f32 %v1309, %v1309
    %v1313 = vsel %vm1170, %v1310, 0.0
    %v1314 = vsel %vm1170, %v1311, 0.0
    %v1315 = vadd.f32 %v1313, %v1314
    %v1316 = vsel %vm1170, %v1312, 0.0
    %v1317 = vadd.f32 %v1315, %v1316
    %1318 = vadd.xlane.f32.xlu0 %v1317
    %v1319 = vpop.xlane.xlu0 %1318
    %v1320 = vrot.slane %v1319, 4
    %v1321 = vadd.f32 %v1319, %v1320
    %v1322 = vrot.slane %v1321, 2
    %v1323 = vadd.f32 %v1321, %v1322
    %v1324 = vrot.slane %v1323, 1
    %v1325 = vadd.f32 %v1323, %v1324
    %s1326 = vtos %v1325
    %s1327 = smul.f32 %s1326, 0.013888889
    %s1328 = sadd.f32 %s1327, 1e-05
    %v1329 = vstv %s1328
    %v1330 = vrsqrt.pop %v1329
    %s1331 = vtos %v1330
    %s1332 = sld [smem:[#allocation2 + $0x56]]
    %v1333 = vstv %s1331
    %v1334 = vmul.f32 %v1307, %v1333
    %v1335 = vmul.f32 %v1308, %v1333
    %v1336 = vmul.f32 %v1309, %v1333
    %v1337 = vstv %s1332
    %v1338 = vmul.f32 %v1337, %v1334
    %v1339 = vmul.f32 %v1337, %v1335
    %v1340 = vmul.f32 %v1337, %v1336
    %s1341 = sld [smem:[#allocation2 + $0x59]]
    %v1342 = vstv %s1341
    %v1343 = vadd.f32 %v1338, %v1342
    %v1344 = vadd.f32 %v1339, %v1342
    %v1345 = vadd.f32 %v1340, %v1342
    %1346 = vst.msk [vmem:[#allocation5] sm:$0x7] %vm1170, %v1223
    %1347 = vst.msk [vmem:[#allocation5 + $0x4] sm:$0x7] %vm1170, %v1224
    %1348 = vst.msk [vmem:[#allocation5 + $0x8] sm:$0x7] %vm1170, %v1225
    %1349 = vst.msk [vmem:[#allocation5 + $0xc] sm:$0x7] %vm1170, %v1283
    %1350 = vst.msk [vmem:[#allocation5 + $0x10] sm:$0x7] %vm1170, %v1284
    %1351 = vst.msk [vmem:[#allocation5 + $0x14] sm:$0x7] %vm1170, %v1285
    %1352 = vst.msk [vmem:[#allocation5 + $0x18] sm:$0x7] %vm1170, %v1343
    %1353 = vst.msk [vmem:[#allocation5 + $0x1c] sm:$0x7] %vm1170, %v1344
    %1354 = vst.msk [vmem:[#allocation5 + $0x20] sm:$0x7] %vm1170, %v1345
    // Predicated region
    $region14: #{model_forward.1} parent=1 // pred_check
      _
    $region15: #{model_forward.1} parent=1 // pred_check_branch
      %1356 = sbr.rel (0) target = $region17
    $region16: #{model_forward.1} parent=1 // pred_region
      %s1358 = ssub.s32 576, 576
      %1359 = vsyncadd [#allocation3], %s1358
      %s1360 = sshll.u32 [#allocation5], 4
      %s1361 = int_to_ptr.vmem [resolvable:$true] %s1360
      %1366 = dma.vmem_to_hbm [thread:$0]  %s1361, 576, %s2, [#allocation3], 64, 64, 4
    $region17: #{model_forward.1} parent=1 // pred_fallthru
      _
    // Predicated region
    $region18: #{model_forward.1} parent=1 // pred_check
      _
    $region19: #{model_forward.1} parent=1 // pred_check_branch
      %1368 = sbr.rel (0) target = $region21
    $region20: #{model_forward.1} parent=1 // pred_region
      %1369 = dma.done [#allocation3], 576
    $region21: #{model_forward.1} parent=1 // pred_fallthru
      _
    %1370 = vsyncpa [#allocation3], 1
    %1371 = vsyncpa [#allocation4], 1

</llo_original>
